<compile_context>
chip_gen: v6e
topology: v6e:2x2x1
jax: 0.10.0
libtpu: 0.0.40
codegen_flags: <defaults>
</compile_context>

<pallas_src>
import functools

import numpy as np

import jax
import jax.numpy as jnp
from jax import lax
from jax.experimental import pallas as pl
from jax.experimental.pallas import tpu as pltpu


# --------------------------------------------------------------------------
# Fused kernel: one grid point per batch element, channels-first throughout.
# --------------------------------------------------------------------------
def _fused_attention_kernel(
    x_ref,      # (1, C, N)   f32  activations for this batch (channels-first)
    pool_ref,   # (Nk, N)     bf16 constant pooling operator
    wq_ref,     # (C, C)      bf16 q projection (conv weight, scale pre-folded)
    wkT_ref,    # (C, C)      bf16 k projection, transposed (c_in, c_out)
    wv_ref,     # (C, C)      bf16 v projection (c_out, c_in)
    wo_ref,     # (Co, C)     bf16 output projection (conv weight)
    b_ref,      # (Co, 1)     f32  output bias
    posT_ref,   # (Nk, N)     f32  pos_embed transposed
    o_ref,      # (1, Co, N)  f32  output (channels-first)
    q_scr,      # (C, N)      f32  VMEM scratch
    k_scr,      # (Nk, C)     f32  VMEM scratch
    v_scr,      # (C, Nk)     f32  VMEM scratch
    *,
    heads,
):
    C, N = q_scr.shape
    Nk = k_scr.shape[0]
    d = C // heads
    f32 = jnp.float32
    bf16 = jnp.bfloat16

    xb = x_ref[0].astype(bf16)                                   # (C, N)

    # ---- pooling + full-width projections: 4 wide MXU pushes total ------
    # px[m, c] = sum_n pool[m, n] * x[c, n]   (pool @ x.T -> channels-last)
    px = lax.dot_general(
        pool_ref[...], xb,
        dimension_numbers=(((1,), (1,)), ((), ())),
        preferred_element_type=f32)                              # (Nk, C)
    pxb = px.astype(bf16)

    q_scr[...] = jnp.dot(wq_ref[...], xb,
                         preferred_element_type=f32)             # (C, N)  scale folded
    k_scr[...] = jax.nn.sigmoid(
        jnp.dot(pxb, wkT_ref[...], preferred_element_type=f32))  # (Nk, C)
    v_scr[...] = jax.nn.sigmoid(
        lax.dot_general(wv_ref[...], pxb,
                        dimension_numbers=(((1,), (1,)), ((), ())),
                        preferred_element_type=f32))             # (C, Nk)

    posT = posT_ref[...]                                         # (Nk, N)

    # ---- per-head attention in channels-first ("transposed") space ------
    # heads=4 static unroll; all heads are independent, so the scheduler can
    # interleave them (a heads-batched dot_general would unroll into the same
    # d=8 MXU pushes at these shapes anyway).
    outs = []
    for h in range(heads):
        qh = q_scr[h * d:(h + 1) * d, :].astype(bf16)            # (d, N)
        kh = k_scr[:, h * d:(h + 1) * d].astype(bf16)            # (Nk, d)
        vh = v_scr[h * d:(h + 1) * d, :].astype(bf16)            # (d, Nk)

        # dotsT[m, n] = sum_dd k[m,dd] * q_scaled[dd,n]  (+ posᵀ)
        dotsT = jnp.dot(kh, qh, preferred_element_type=f32) + posT   # (Nk, N)

        # softmax over the key axis (rows).
        m = jnp.max(dotsT, axis=0, keepdims=True)                # (1, N)
        e = jnp.exp(dotsT - m)
        attnT = e * pl.reciprocal(jnp.sum(e, axis=0, keepdims=True),
                                  approx=True)                   # (Nk, N)

        # out_h[dd, n] = sum_m v[dd,m] * attn[n,m]
        outs.append(jnp.dot(vh, attnT.astype(bf16),
                            preferred_element_type=f32))         # (d, N)

    out_cf = jnp.concatenate(outs, axis=0).astype(bf16)          # (C, N)

    # ---- fused output projection + bias ---------------------------------
    y = jnp.dot(wo_ref[...], out_cf, preferred_element_type=f32) + b_ref[...]
    o_ref[0] = y.astype(o_ref.dtype)                             # (Co, N)


# --------------------------------------------------------------------------
# Host-side constants & parameter preparation (done once, outside jit).
# --------------------------------------------------------------------------
def build_pool_matrix(H, W):
    """Linear operator implementing the three adaptive pools + concat order."""
    N = H * W
    Nk = H + W + (H // 2) * (W // 2)
    P = np.zeros((Nk, N), np.float32)
    for i in range(H):                       # adaptive_avg_pool2d(k, (None, 1))
        for j in range(W):
            P[i, i * W + j] = 1.0 / W
    for j in range(W):                       # adaptive_avg_pool2d(k, (1, None))
        for i in range(H):
            P[H + j, i * W + j] = 1.0 / H
    for p in range(H // 2):                  # adaptive_avg_pool2d(k, (H//2, W//2))
        for q in range(W // 2):
            r = H + W + p * (W // 2) + q
            for a in range(2):
                for b in range(2):
                    P[r, (2 * p + a) * W + (2 * q + b)] = 0.25
    return P


def init_params(key, in_channels, out_channels, ih, iw):
    """Deterministic synthetic parameterization of the PyTorch module."""
    k1, k2, k3, k4 = jax.random.split(key, 4)
    w_qkv = jax.random.normal(k1, (3 * in_channels, in_channels), jnp.float32) * (
        in_channels ** -0.5
    )
    w_out = jax.random.normal(k2, (out_channels, in_channels), jnp.float32) * (
        in_channels ** -0.5
    )
    b_out = jax.random.normal(k3, (out_channels,), jnp.float32) * 0.01
    # NOTE: the PyTorch module sizes pos_embed with (ih//2)**2, which only
    # equals the pooled length (ih//2)*(iw//2) for square inputs; we use the
    # consistent formula (the test uses ih == iw, where they coincide).
    n_k = ih + iw + (ih // 2) * (iw // 2)
    pos_embed = jnp.clip(
        jax.random.normal(k4, (1, ih * iw, n_k), jnp.float32) * 0.2, -2.0, 2.0
    )   # trunc_normal_(std=0.2) approximation
    return dict(w_qkv=w_qkv, w_out=w_out, b_out=b_out, pos_embed=pos_embed)


def prepare_kernel_params(params, heads, H, W):
    """One-time reshuffle of weights into kernel-friendly (full-width) layouts."""
    w_qkv = params["w_qkv"]                  # (3C, C) conv weight (out, in)
    C = w_qkv.shape[1]
    scale = float(C // heads) ** -0.5

    wq = (w_qkv[:C] * scale).astype(jnp.bfloat16)        # (C, C):  q_t = Wq·x
    wkT = w_qkv[C:2 * C].T.astype(jnp.bfloat16)          # (C, C):  k = px·Wkᵀ
    wv = w_qkv[2 * C:3 * C].astype(jnp.bfloat16)         # (C, C):  v_t = Wv·pxᵀ
    wo = params["w_out"].astype(jnp.bfloat16)            # (Co, C)
    bias = params["b_out"].reshape(-1, 1).astype(jnp.float32)      # (Co, 1)
    posT = jnp.transpose(params["pos_embed"][0]).astype(jnp.float32)  # (Nk, N)
    pool = jnp.asarray(build_pool_matrix(H, W)).astype(jnp.bfloat16)  # (Nk, N)

    return dict(wq=wq, wkT=wkT, wv=wv, wo=wo, bias=bias, posT=posT, pool=pool)


# --------------------------------------------------------------------------
# Forward pass: single fused pallas_call, no layout transposes in the wrapper.
# --------------------------------------------------------------------------
@functools.partial(jax.jit, static_argnames=("heads",))
def attention_forward(kp, x, *, heads):
    """x: (B, C, H, W) NCHW -> (B, out_C, H, W) NCHW."""
    B, C, H, W = x.shape
    N = H * W
    out_C = kp["wo"].shape[0]
    Nk = kp["pool"].shape[0]

    x_cn = x.reshape(B, C, N)                # pure reshape (channels-first)

    kernel = functools.partial(_fused_attention_kernel, heads=heads)
    y = pl.pallas_call(
        kernel,
        out_shape=jax.ShapeDtypeStruct((B, out_C, N), jnp.float32),
        grid=(B,),
        in_specs=[
            pl.BlockSpec((1, C, N), lambda b: (b, 0, 0)),      # x
            pl.BlockSpec((Nk, N), lambda b: (0, 0)),           # pool
            pl.BlockSpec((C, C), lambda b: (0, 0)),            # wq (scaled)
            pl.BlockSpec((C, C), lambda b: (0, 0)),            # wkT
            pl.BlockSpec((C, C), lambda b: (0, 0)),            # wv
            pl.BlockSpec((out_C, C), lambda b: (0, 0)),        # wo
            pl.BlockSpec((out_C, 1), lambda b: (0, 0)),        # bias
            pl.BlockSpec((Nk, N), lambda b: (0, 0)),           # posT
        ],
        out_specs=pl.BlockSpec((1, out_C, N), lambda b: (b, 0, 0)),
        scratch_shapes=[
            pltpu.VMEM((C, N), jnp.float32),                   # q (channels-first)
            pltpu.VMEM((Nk, C), jnp.float32),                  # k (channels-last)
            pltpu.VMEM((C, Nk), jnp.float32),                  # v (channels-first)
        ],
        compiler_params=pltpu.CompilerParams(
            dimension_semantics=("parallel",)),                # 2 TCs on v7x split batch
    )(x_cn, kp["pool"], kp["wq"], kp["wkT"], kp["wv"], kp["wo"],
      kp["bias"], kp["posT"])

    return y.reshape(B, out_C, H, W)         # pure reshape back to NCHW


# --------------------------------------------------------------------------
# Pure-JAX reference mirroring the PyTorch forward (f32, for a sanity check).
# --------------------------------------------------------------------------
def reference_forward(params, x, heads):
    B, C, H, W = x.shape
    d = C // heads
    scale = d ** -0.5
    N = H * W

    qkv = jnp.einsum("bchw,oc->bohw", x, params["w_qkv"])
    q, k, v = jnp.split(qkv, 3, axis=1)

    q = q.reshape(B, heads, d, N).transpose(0, 1, 3, 2)            # (B,h,N,d)

    def pool(t):                                                   # (B,C,H,W)
        t_h = t.mean(axis=3)                                       # (B,C,H)
        t_w = t.mean(axis=2)                                       # (B,C,W)
        t_p = (
            t.reshape(B, C, H // 2, 2, W // 2, 2)
            .mean(axis=(3, 5))
            .reshape(B, C, -1)
        )
        s = jax.nn.sigmoid(jnp.concatenate([t_h, t_w, t_p], axis=2))
        s = s.transpose(0, 2, 1)                                   # (B,Nk,C)
        return s.reshape(B, -1, heads, d).transpose(0, 2, 1, 3)    # (B,h,Nk,d)

    k = pool(k)
    v = pool(v)

    dots = jnp.einsum("bhqd,bhkd->bhqk", q, k) * scale + params["pos_embed"]
    attn = jax.nn.softmax(dots, axis=-1)
    out = jnp.einsum("bhqk,bhkd->bhqd", attn, v)                   # (B,h,N,d)
    out = out.transpose(0, 1, 3, 2).reshape(B, C, H, W)            # (B,(h d),H,W)
    y = jnp.einsum("bchw,oc->bohw", out, params["w_out"])
    return y + params["b_out"][None, :, None, None]


# --------------------------------------------------------------------------
if __name__ == "__main__":
    B, C, H, W = 2, 32, 8, 8
    heads = 4
    out_channels = 32

    key = jax.random.PRNGKey(0)
    k_param, k_x = jax.random.split(key)
    params = init_params(k_param, C, out_channels, H, W)
    kparams = prepare_kernel_params(params, heads, H, W)
    x = jax.random.normal(k_x, (B, C, H, W), jnp.float32)

    y = attention_forward(kparams, x, heads=heads)
    y = jax.block_until_ready(y)

    y_ref = reference_forward(params, x, heads)

    assert y.shape == (B, out_channels, H, W), y.shape
    assert bool(jnp.all(jnp.isfinite(y)))
    # bf16 MXU operands + approx reciprocal: comfortably within 5e-2 of the
    # f32 reference at these magnitudes.
    assert bool(jnp.allclose(y, y_ref, atol=5e-2, rtol=5e-2)), float(
        jnp.max(jnp.abs(y - y_ref))
    )
    print("KERNEL_OK")
</pallas_src>

<mosaic_0001>
module attributes {stable_mosaic.version = 11 : i64} {
  func.func @_fused_attention_kernel(%arg0: i32, %arg1: memref<1x32x64xf32, #tpu.memory_space<vmem>>, %arg2: memref<32x64xbf16, #tpu.memory_space<vmem>>, %arg3: memref<32x32xbf16, #tpu.memory_space<vmem>>, %arg4: memref<32x32xbf16, #tpu.memory_space<vmem>>, %arg5: memref<32x32xbf16, #tpu.memory_space<vmem>>, %arg6: memref<32x32xbf16, #tpu.memory_space<vmem>>, %arg7: memref<32x1xf32, #tpu.memory_space<vmem>>, %arg8: memref<32x64xf32, #tpu.memory_space<vmem>>, %arg9: memref<1x32x64xf32, #tpu.memory_space<vmem>>, %arg10: memref<32x64xf32, #tpu.memory_space<vmem>>, %arg11: memref<32x32xf32, #tpu.memory_space<vmem>>, %arg12: memref<32x32xf32, #tpu.memory_space<vmem>>) attributes {dimension_semantics = [#tpu.dimension_semantics<parallel>], iteration_bounds = array<i64: 2>, scalar_prefetch = 0 : i64, scratch_operands = 3 : i64, tpu.core_type = #tpu.core_type<tc>, window_params = [{transform_indices = @transform_0, window_bounds = array<i64: 1, 32, 64>}, {pipeline_mode = #tpu.pipeline_mode<synchronous>, transform_indices = @transform_1, window_bounds = array<i64: 32, 64>}, {pipeline_mode = #tpu.pipeline_mode<synchronous>, transform_indices = @transform_2, window_bounds = array<i64: 32, 32>}, {pipeline_mode = #tpu.pipeline_mode<synchronous>, transform_indices = @transform_3, window_bounds = array<i64: 32, 32>}, {pipeline_mode = #tpu.pipeline_mode<synchronous>, transform_indices = @transform_4, window_bounds = array<i64: 32, 32>}, {pipeline_mode = #tpu.pipeline_mode<synchronous>, transform_indices = @transform_5, window_bounds = array<i64: 32, 32>}, {pipeline_mode = #tpu.pipeline_mode<synchronous>, transform_indices = @transform_6, window_bounds = array<i64: 32, 1>}, {pipeline_mode = #tpu.pipeline_mode<synchronous>, transform_indices = @transform_7, window_bounds = array<i64: 32, 64>}, {transform_indices = @transform_8, window_bounds = array<i64: 1, 32, 64>}]} {
    %c0 = arith.constant 0 : index
    %c0_0 = arith.constant 0 : index
    %c0_1 = arith.constant 0 : index
    %0 = vector.load %arg1[%c0, %c0_0, %c0_1] : memref<1x32x64xf32, #tpu.memory_space<vmem>>, vector<1x32x64xf32>
    %1 = vector.shape_cast %0 : vector<1x32x64xf32> to vector<32x64xf32>
    %2 = arith.truncf %1 : vector<32x64xf32> to vector<32x64xbf16>
    %c0_2 = arith.constant 0 : index
    %c0_3 = arith.constant 0 : index
    %3 = vector.load %arg2[%c0_2, %c0_3] : memref<32x64xbf16, #tpu.memory_space<vmem>>, vector<32x64xbf16>
    %cst = arith.constant dense<0.000000e+00> : vector<32x32xf32>
    %4 = tpu.matmul %3, %2, %cst {dimension_numbers = #tpu.dot_dimension_numbers<[1], [1], [0], [0], [0, 0, 1, 0], [], []>} : vector<32x64xbf16>, vector<32x64xbf16>, vector<32x32xf32> -> vector<32x32xf32>
    %5 = arith.truncf %4 : vector<32x32xf32> to vector<32x32xbf16>
    %c0_4 = arith.constant 0 : index
    %c0_5 = arith.constant 0 : index
    %6 = vector.load %arg3[%c0_4, %c0_5] : memref<32x32xbf16, #tpu.memory_space<vmem>>, vector<32x32xbf16>
    %cst_6 = arith.constant dense<0.000000e+00> : vector<32x64xf32>
    %7 = tpu.matmul %6, %2, %cst_6 {dimension_numbers = #tpu.dot_dimension_numbers<[1], [0], [0], [1], [0, 0, 1, 1], [], []>} : vector<32x32xbf16>, vector<32x64xbf16>, vector<32x64xf32> -> vector<32x64xf32>
    %c0_7 = arith.constant 0 : index
    %c0_8 = arith.constant 0 : index
    %8 = vector.load %arg10[%c0_7, %c0_8] : memref<32x64xf32, #tpu.memory_space<vmem>>, vector<32x64xf32>
    tpu.vector_store %arg10[%c0_7, %c0_8], %7 {strides = array<i32>} : memref<32x64xf32, #tpu.memory_space<vmem>>, vector<32x64xf32>,
    %c0_9 = arith.constant 0 : index
    %c0_10 = arith.constant 0 : index
    %9 = vector.load %arg4[%c0_9, %c0_10] : memref<32x32xbf16, #tpu.memory_space<vmem>>, vector<32x32xbf16>
    %cst_11 = arith.constant dense<0.000000e+00> : vector<32x32xf32>
    %10 = tpu.matmul %5, %9, %cst_11 {dimension_numbers = #tpu.dot_dimension_numbers<[1], [0], [0], [1], [0, 0, 1, 1], [], []>} : vector<32x32xbf16>, vector<32x32xbf16>, vector<32x32xf32> -> vector<32x32xf32>
    %11 = arith.negf %10 : vector<32x32xf32>
    %12 = math.exp %11 : vector<32x32xf32>
    %cst_12 = arith.constant 1.000000e+00 : f32
    %13 = vector.broadcast %cst_12 : f32 to vector<32x32xf32>
    %14 = arith.addf %13, %12 : vector<32x32xf32>
    %15 = arith.divf %13, %14 : vector<32x32xf32>
    %c0_13 = arith.constant 0 : index
    %c0_14 = arith.constant 0 : index
    %16 = vector.load %arg11[%c0_13, %c0_14] : memref<32x32xf32, #tpu.memory_space<vmem>>, vector<32x32xf32>
    tpu.vector_store %arg11[%c0_13, %c0_14], %15 {strides = array<i32>} : memref<32x32xf32, #tpu.memory_space<vmem>>, vector<32x32xf32>,
    %c0_15 = arith.constant 0 : index
    %c0_16 = arith.constant 0 : index
    %17 = vector.load %arg5[%c0_15, %c0_16] : memref<32x32xbf16, #tpu.memory_space<vmem>>, vector<32x32xbf16>
    %cst_17 = arith.constant dense<0.000000e+00> : vector<32x32xf32>
    %18 = tpu.matmul %17, %5, %cst_17 {dimension_numbers = #tpu.dot_dimension_numbers<[1], [1], [0], [0], [0, 0, 1, 0], [], []>} : vector<32x32xbf16>, vector<32x32xbf16>, vector<32x32xf32> -> vector<32x32xf32>
    %19 = arith.negf %18 : vector<32x32xf32>
    %20 = math.exp %19 : vector<32x32xf32>
    %cst_18 = arith.constant 1.000000e+00 : f32
    %21 = vector.broadcast %cst_18 : f32 to vector<32x32xf32>
    %22 = arith.addf %21, %20 : vector<32x32xf32>
    %23 = arith.divf %21, %22 : vector<32x32xf32>
    %c0_19 = arith.constant 0 : index
    %c0_20 = arith.constant 0 : index
    %24 = vector.load %arg12[%c0_19, %c0_20] : memref<32x32xf32, #tpu.memory_space<vmem>>, vector<32x32xf32>
    tpu.vector_store %arg12[%c0_19, %c0_20], %23 {strides = array<i32>} : memref<32x32xf32, #tpu.memory_space<vmem>>, vector<32x32xf32>,
    %c0_21 = arith.constant 0 : index
    %c0_22 = arith.constant 0 : index
    %25 = vector.load %arg8[%c0_21, %c0_22] : memref<32x64xf32, #tpu.memory_space<vmem>>, vector<32x64xf32>
    %c0_23 = arith.constant 0 : index
    %c0_24 = arith.constant 0 : index
    %26 = vector.load %arg10[%c0_23, %c0_24] : memref<32x64xf32, #tpu.memory_space<vmem>>, vector<8x64xf32>
    %27 = arith.truncf %26 : vector<8x64xf32> to vector<8x64xbf16>
    %c0_25 = arith.constant 0 : index
    %c0_26 = arith.constant 0 : index
    %28 = vector.load %arg11[%c0_25, %c0_26] : memref<32x32xf32, #tpu.memory_space<vmem>>, vector<32x8xf32>
    %29 = arith.truncf %28 : vector<32x8xf32> to vector<32x8xbf16>
    %c0_27 = arith.constant 0 : index
    %c0_28 = arith.constant 0 : index
    %30 = vector.load %arg12[%c0_27, %c0_28] : memref<32x32xf32, #tpu.memory_space<vmem>>, vector<8x32xf32>
    %31 = arith.truncf %30 : vector<8x32xf32> to vector<8x32xbf16>
    %cst_29 = arith.constant dense<0.000000e+00> : vector<32x64xf32>
    %32 = tpu.matmul %29, %27, %cst_29 {dimension_numbers = #tpu.dot_dimension_numbers<[1], [0], [0], [1], [0, 0, 1, 1], [], []>} : vector<32x8xbf16>, vector<8x64xbf16>, vector<32x64xf32> -> vector<32x64xf32>
    %33 = arith.addf %32, %25 : vector<32x64xf32>
    %cst_30 = arith.constant dense<0xFF800000> : vector<64xf32>
    %34 = vector.multi_reduction <maximumf>, %33, %cst_30 [0] : vector<32x64xf32> to vector<64xf32>
    %35 = vector.shape_cast %34 : vector<64xf32> to vector<1x64xf32>
    %36 = vector.broadcast %35 : vector<1x64xf32> to vector<32x64xf32>
    %37 = arith.subf %33, %36 : vector<32x64xf32>
    %38 = math.exp %37 : vector<32x64xf32>
    %cst_31 = arith.constant dense<0.000000e+00> : vector<64xf32>
    %39 = vector.multi_reduction <add>, %38, %cst_31 [0] : vector<32x64xf32> to vector<64xf32>
    %40 = vector.shape_cast %39 : vector<64xf32> to vector<1x64xf32>
    %41 = tpu.reciprocal %40 {approx = true} : vector<1x64xf32> -> vector<1x64xf32>
    %42 = vector.broadcast %41 : vector<1x64xf32> to vector<32x64xf32>
    %43 = arith.mulf %38, %42 : vector<32x64xf32>
    %44 = arith.truncf %43 : vector<32x64xf32> to vector<32x64xbf16>
    %cst_32 = arith.constant dense<0.000000e+00> : vector<8x64xf32>
    %45 = tpu.matmul %31, %44, %cst_32 {dimension_numbers = #tpu.dot_dimension_numbers<[1], [0], [0], [1], [0, 0, 1, 1], [], []>} : vector<8x32xbf16>, vector<32x64xbf16>, vector<8x64xf32> -> vector<8x64xf32>
    %c8 = arith.constant 8 : index
    %c0_33 = arith.constant 0 : index
    %46 = vector.load %arg10[%c8, %c0_33] : memref<32x64xf32, #tpu.memory_space<vmem>>, vector<8x64xf32>
    %47 = arith.truncf %46 : vector<8x64xf32> to vector<8x64xbf16>
    %c0_34 = arith.constant 0 : index
    %c8_35 = arith.constant 8 : index
    %48 = vector.load %arg11[%c0_34, %c8_35] : memref<32x32xf32, #tpu.memory_space<vmem>>, vector<32x8xf32>
    %49 = arith.truncf %48 : vector<32x8xf32> to vector<32x8xbf16>
    %c8_36 = arith.constant 8 : index
    %c0_37 = arith.constant 0 : index
    %50 = vector.load %arg12[%c8_36, %c0_37] : memref<32x32xf32, #tpu.memory_space<vmem>>, vector<8x32xf32>
    %51 = arith.truncf %50 : vector<8x32xf32> to vector<8x32xbf16>
    %cst_38 = arith.constant dense<0.000000e+00> : vector<32x64xf32>
    %52 = tpu.matmul %49, %47, %cst_38 {dimension_numbers = #tpu.dot_dimension_numbers<[1], [0], [0], [1], [0, 0, 1, 1], [], []>} : vector<32x8xbf16>, vector<8x64xbf16>, vector<32x64xf32> -> vector<32x64xf32>
    %53 = arith.addf %52, %25 : vector<32x64xf32>
    %cst_39 = arith.constant dense<0xFF800000> : vector<64xf32>
    %54 = vector.multi_reduction <maximumf>, %53, %cst_39 [0] : vector<32x64xf32> to vector<64xf32>
    %55 = vector.shape_cast %54 : vector<64xf32> to vector<1x64xf32>
    %56 = vector.broadcast %55 : vector<1x64xf32> to vector<32x64xf32>
    %57 = arith.subf %53, %56 : vector<32x64xf32>
    %58 = math.exp %57 : vector<32x64xf32>
    %cst_40 = arith.constant dense<0.000000e+00> : vector<64xf32>
    %59 = vector.multi_reduction <add>, %58, %cst_40 [0] : vector<32x64xf32> to vector<64xf32>
    %60 = vector.shape_cast %59 : vector<64xf32> to vector<1x64xf32>
    %61 = tpu.reciprocal %60 {approx = true} : vector<1x64xf32> -> vector<1x64xf32>
    %62 = vector.broadcast %61 : vector<1x64xf32> to vector<32x64xf32>
    %63 = arith.mulf %58, %62 : vector<32x64xf32>
    %64 = arith.truncf %63 : vector<32x64xf32> to vector<32x64xbf16>
    %cst_41 = arith.constant dense<0.000000e+00> : vector<8x64xf32>
    %65 = tpu.matmul %51, %64, %cst_41 {dimension_numbers = #tpu.dot_dimension_numbers<[1], [0], [0], [1], [0, 0, 1, 1], [], []>} : vector<8x32xbf16>, vector<32x64xbf16>, vector<8x64xf32> -> vector<8x64xf32>
    %c16 = arith.constant 16 : index
    %c0_42 = arith.constant 0 : index
    %66 = vector.load %arg10[%c16, %c0_42] : memref<32x64xf32, #tpu.memory_space<vmem>>, vector<8x64xf32>
    %67 = arith.truncf %66 : vector<8x64xf32> to vector<8x64xbf16>
    %c0_43 = arith.constant 0 : index
    %c16_44 = arith.constant 16 : index
    %68 = vector.load %arg11[%c0_43, %c16_44] : memref<32x32xf32, #tpu.memory_space<vmem>>, vector<32x8xf32>
    %69 = arith.truncf %68 : vector<32x8xf32> to vector<32x8xbf16>
    %c16_45 = arith.constant 16 : index
    %c0_46 = arith.constant 0 : index
    %70 = vector.load %arg12[%c16_45, %c0_46] : memref<32x32xf32, #tpu.memory_space<vmem>>, vector<8x32xf32>
    %71 = arith.truncf %70 : vector<8x32xf32> to vector<8x32xbf16>
    %cst_47 = arith.constant dense<0.000000e+00> : vector<32x64xf32>
    %72 = tpu.matmul %69, %67, %cst_47 {dimension_numbers = #tpu.dot_dimension_numbers<[1], [0], [0], [1], [0, 0, 1, 1], [], []>} : vector<32x8xbf16>, vector<8x64xbf16>, vector<32x64xf32> -> vector<32x64xf32>
    %73 = arith.addf %72, %25 : vector<32x64xf32>
    %cst_48 = arith.constant dense<0xFF800000> : vector<64xf32>
    %74 = vector.multi_reduction <maximumf>, %73, %cst_48 [0] : vector<32x64xf32> to vector<64xf32>
    %75 = vector.shape_cast %74 : vector<64xf32> to vector<1x64xf32>
    %76 = vector.broadcast %75 : vector<1x64xf32> to vector<32x64xf32>
    %77 = arith.subf %73, %76 : vector<32x64xf32>
    %78 = math.exp %77 : vector<32x64xf32>
    %cst_49 = arith.constant dense<0.000000e+00> : vector<64xf32>
    %79 = vector.multi_reduction <add>, %78, %cst_49 [0] : vector<32x64xf32> to vector<64xf32>
    %80 = vector.shape_cast %79 : vector<64xf32> to vector<1x64xf32>
    %81 = tpu.reciprocal %80 {approx = true} : vector<1x64xf32> -> vector<1x64xf32>
    %82 = vector.broadcast %81 : vector<1x64xf32> to vector<32x64xf32>
    %83 = arith.mulf %78, %82 : vector<32x64xf32>
    %84 = arith.truncf %83 : vector<32x64xf32> to vector<32x64xbf16>
    %cst_50 = arith.constant dense<0.000000e+00> : vector<8x64xf32>
    %85 = tpu.matmul %71, %84, %cst_50 {dimension_numbers = #tpu.dot_dimension_numbers<[1], [0], [0], [1], [0, 0, 1, 1], [], []>} : vector<8x32xbf16>, vector<32x64xbf16>, vector<8x64xf32> -> vector<8x64xf32>
    %c24 = arith.constant 24 : index
    %c0_51 = arith.constant 0 : index
    %86 = vector.load %arg10[%c24, %c0_51] : memref<32x64xf32, #tpu.memory_space<vmem>>, vector<8x64xf32>
    %87 = arith.truncf %86 : vector<8x64xf32> to vector<8x64xbf16>
    %c0_52 = arith.constant 0 : index
    %c24_53 = arith.constant 24 : index
    %88 = vector.load %arg11[%c0_52, %c24_53] : memref<32x32xf32, #tpu.memory_space<vmem>>, vector<32x8xf32>
    %89 = arith.truncf %88 : vector<32x8xf32> to vector<32x8xbf16>
    %c24_54 = arith.constant 24 : index
    %c0_55 = arith.constant 0 : index
    %90 = vector.load %arg12[%c24_54, %c0_55] : memref<32x32xf32, #tpu.memory_space<vmem>>, vector<8x32xf32>
    %91 = arith.truncf %90 : vector<8x32xf32> to vector<8x32xbf16>
    %cst_56 = arith.constant dense<0.000000e+00> : vector<32x64xf32>
    %92 = tpu.matmul %89, %87, %cst_56 {dimension_numbers = #tpu.dot_dimension_numbers<[1], [0], [0], [1], [0, 0, 1, 1], [], []>} : vector<32x8xbf16>, vector<8x64xbf16>, vector<32x64xf32> -> vector<32x64xf32>
    %93 = arith.addf %92, %25 : vector<32x64xf32>
    %cst_57 = arith.constant dense<0xFF800000> : vector<64xf32>
    %94 = vector.multi_reduction <maximumf>, %93, %cst_57 [0] : vector<32x64xf32> to vector<64xf32>
    %95 = vector.shape_cast %94 : vector<64xf32> to vector<1x64xf32>
    %96 = vector.broadcast %95 : vector<1x64xf32> to vector<32x64xf32>
    %97 = arith.subf %93, %96 : vector<32x64xf32>
    %98 = math.exp %97 : vector<32x64xf32>
    %cst_58 = arith.constant dense<0.000000e+00> : vector<64xf32>
    %99 = vector.multi_reduction <add>, %98, %cst_58 [0] : vector<32x64xf32> to vector<64xf32>
    %100 = vector.shape_cast %99 : vector<64xf32> to vector<1x64xf32>
    %101 = tpu.reciprocal %100 {approx = true} : vector<1x64xf32> -> vector<1x64xf32>
    %102 = vector.broadcast %101 : vector<1x64xf32> to vector<32x64xf32>
    %103 = arith.mulf %98, %102 : vector<32x64xf32>
    %104 = arith.truncf %103 : vector<32x64xf32> to vector<32x64xbf16>
    %cst_59 = arith.constant dense<0.000000e+00> : vector<8x64xf32>
    %105 = tpu.matmul %91, %104, %cst_59 {dimension_numbers = #tpu.dot_dimension_numbers<[1], [0], [0], [1], [0, 0, 1, 1], [], []>} : vector<8x32xbf16>, vector<32x64xbf16>, vector<8x64xf32> -> vector<8x64xf32>
    %106 = tpu.concatenate %45, %65, %85, %105 in 0 : vector<8x64xf32>, vector<8x64xf32>, vector<8x64xf32>, vector<8x64xf32> -> vector<32x64xf32>
    %107 = arith.truncf %106 : vector<32x64xf32> to vector<32x64xbf16>
    %c0_60 = arith.constant 0 : index
    %c0_61 = arith.constant 0 : index
    %108 = vector.load %arg6[%c0_60, %c0_61] : memref<32x32xbf16, #tpu.memory_space<vmem>>, vector<32x32xbf16>
    %cst_62 = arith.constant dense<0.000000e+00> : vector<32x64xf32>
    %109 = tpu.matmul %108, %107, %cst_62 {dimension_numbers = #tpu.dot_dimension_numbers<[1], [0], [0], [1], [0, 0, 1, 1], [], []>} : vector<32x32xbf16>, vector<32x64xbf16>, vector<32x64xf32> -> vector<32x64xf32>
    %c0_63 = arith.constant 0 : index
    %c0_64 = arith.constant 0 : index
    %110 = vector.load %arg7[%c0_63, %c0_64] : memref<32x1xf32, #tpu.memory_space<vmem>>, vector<32x1xf32>
    %111 = vector.broadcast %110 : vector<32x1xf32> to vector<32x64xf32>
    %112 = arith.addf %109, %111 : vector<32x64xf32>
    %c0_65 = arith.constant 0 : index
    %c0_66 = arith.constant 0 : index
    %c0_67 = arith.constant 0 : index
    %113 = vector.load %arg9[%c0_65, %c0_66, %c0_67] : memref<1x32x64xf32, #tpu.memory_space<vmem>>, vector<1x32x64xf32>
    %114 = vector.shape_cast %113 : vector<1x32x64xf32> to vector<32x64xf32>
    %115 = vector.shape_cast %112 : vector<32x64xf32> to vector<1x32x64xf32>
    tpu.vector_store %arg9[%c0_65, %c0_66, %c0_67], %115 {strides = array<i32>} : memref<1x32x64xf32, #tpu.memory_space<vmem>>, vector<1x32x64xf32>,
    return
  }
  func.func @transform_0(%arg0: i32) -> (i32, i32, i32) {
    %c0_i32 = arith.constant 0 : i32
    %c0_i32_0 = arith.constant 0 : i32
    %c0_i32_1 = arith.constant 0 : i32
    return %arg0, %c0_i32, %c0_i32_0 : i32, i32, i32
  }
  func.func @transform_1(%arg0: i32) -> (i32, i32) {
    %c0_i32 = arith.constant 0 : i32
    %c0_i32_0 = arith.constant 0 : i32
    %c0_i32_1 = arith.constant 0 : i32
    return %c0_i32, %c0_i32_0 : i32, i32
  }
  func.func @transform_2(%arg0: i32) -> (i32, i32) {
    %c0_i32 = arith.constant 0 : i32
    %c0_i32_0 = arith.constant 0 : i32
    %c0_i32_1 = arith.constant 0 : i32
    return %c0_i32, %c0_i32_0 : i32, i32
  }
  func.func @transform_3(%arg0: i32) -> (i32, i32) {
    %c0_i32 = arith.constant 0 : i32
    %c0_i32_0 = arith.constant 0 : i32
    %c0_i32_1 = arith.constant 0 : i32
    return %c0_i32, %c0_i32_0 : i32, i32
  }
  func.func @transform_4(%arg0: i32) -> (i32, i32) {
    %c0_i32 = arith.constant 0 : i32
    %c0_i32_0 = arith.constant 0 : i32
    %c0_i32_1 = arith.constant 0 : i32
    return %c0_i32, %c0_i32_0 : i32, i32
  }
  func.func @transform_5(%arg0: i32) -> (i32, i32) {
    %c0_i32 = arith.constant 0 : i32
    %c0_i32_0 = arith.constant 0 : i32
    %c0_i32_1 = arith.constant 0 : i32
    return %c0_i32, %c0_i32_0 : i32, i32
  }
  func.func @transform_6(%arg0: i32) -> (i32, i32) {
    %c0_i32 = arith.constant 0 : i32
    %c0_i32_0 = arith.constant 0 : i32
    %c0_i32_1 = arith.constant 0 : i32
    return %c0_i32, %c0_i32_0 : i32, i32
  }
  func.func @transform_7(%arg0: i32) -> (i32, i32) {
    %c0_i32 = arith.constant 0 : i32
    %c0_i32_0 = arith.constant 0 : i32
    %c0_i32_1 = arith.constant 0 : i32
    return %c0_i32, %c0_i32_0 : i32, i32
  }
  func.func @transform_8(%arg0: i32) -> (i32, i32, i32) {
    %c0_i32 = arith.constant 0 : i32
    %c0_i32_0 = arith.constant 0 : i32
    %c0_i32_1 = arith.constant 0 : i32
    return %arg0, %c0_i32, %c0_i32_0 : i32, i32, i32
  }
}

</mosaic_0001>

<llo_original>
// kernel: attention_forward.1
$region0: #{attention_forward.1}
  #allocation0 [shape = 'u32[]', space=smem, size = 0x4, offset = 0x4, fixed_abs, tag = 'smem constant byte address 0x4 - core index']
  #allocation1 [shape = 'u32[144,128]{1,0:T(1,128)}', space=vmem, size = 0x12000, scoped, tag = 'internal scratch']
  #allocation2 [shape = 'f32[32,64]{1,0:T(8,128)}', space=vmem, size = 0x4000, scoped, tag = 'scratch operand']
  #allocation3 [shape = 'f32[32,32]{1,0:T(8,128)}', space=vmem, size = 0x4000, scoped, tag = 'scratch operand']
  #allocation4 [shape = 'f32[32,32]{1,0:T(8,128)}', space=vmem, size = 0x4000, scoped, tag = 'scratch operand']
  %s0 = inlined_call_operand.vmem [shape: f32[2,32,64], index: 0, kind: input, shape index: {}]
  %s1 = inlined_call_operand.vmem [shape: bf16[32,64], index: 1, kind: input, shape index: {}]
  %s2 = inlined_call_operand.vmem [shape: bf16[32,32], index: 2, kind: input, shape index: {}]
  %s3 = inlined_call_operand.vmem [shape: bf16[32,32], index: 3, kind: input, shape index: {}]
  %s4 = inlined_call_operand.vmem [shape: bf16[32,32], index: 4, kind: input, shape index: {}]
  %s5 = inlined_call_operand.vmem [shape: bf16[32,32], index: 5, kind: input, shape index: {}]
  %s6 = inlined_call_operand.vmem [shape: f32[32,1], index: 6, kind: input, shape index: {}]
  %s7 = inlined_call_operand.vmem [shape: f32[32,64], index: 7, kind: input, shape index: {}]
  %s8 = inlined_call_operand.vmem [shape: f32[2,32,64], index: 8, kind: output, shape index: {}]
  %s9 = sld [smem:[#allocation0]]
  $region65: #{attention_forward.1} parent=0
    _
  %s11 = ssub.s32 1, %s9
  %s12 = scalar_select 0, %s11, %s9
  loop: start=0, step=1, limit=4
  $region2: #{attention_forward.1} parent=0 // loop_pre_header
    _
  $region3: #{attention_forward.1} parent=0 // loop_header
    %s14 = sphi 0, %s18
    %p15 = scmp.ge.s32.totalorder %s14, 4
    %s24 = sphi 0, %s26
    %s27 = sphi 0, %s24
    %s28 = sphi 0, %s27
    %s44 = sphi 0, %s28
    %s48 = sphi 0, %s48
    %s50 = sphi 0, %s48
    %s51 = sphi 0, %s50
    %s65 = sphi 0, %s51
    %s69 = sphi 0, %s69
    %s71 = sphi 0, %s69
    %s72 = sphi 0, %s71
    %s86 = sphi 0, %s72
    %s90 = sphi 0, %s90
    %s92 = sphi 0, %s90
    %s93 = sphi 0, %s92
    %s107 = sphi 0, %s93
    %s111 = sphi 0, %s111
    %s113 = sphi 0, %s111
    %s114 = sphi 0, %s113
    %s128 = sphi 0, %s114
    %s132 = sphi 0, %s132
    %s134 = sphi 0, %s132
    %s135 = sphi 0, %s134
    %s149 = sphi 0, %s135
    %s153 = sphi 0, %s153
    %s155 = sphi 0, %s153
    %s156 = sphi 0, %s155
    %s170 = sphi 0, %s156
    %s174 = sphi 0, %s174
    %s176 = sphi 0, %s174
    %s177 = sphi 0, %s176
    %s191 = sphi 0, %s177
    %s197 = sphi 0, %s199
    %s200 = sphi 0, %s197
    %s201 = sphi 0, %s200
    %s217 = sphi 0, %s201
  $region4: #{attention_forward.1} parent=0 // loop_header_branch
    %17 = sbr.rel (%p15) target = $region8
  $region5: #{attention_forward.1} parent=0 // loop_body
    %s19 = ssub.s32 %s14, 1
    %s20 = ssub.s32 %s14, 2
    %s21 = sadd.s32 %s14, 1
    %s22 = ssub.s32 %s14, %s21
    %p23 = scmp.eq.s32.totalorder %s22, 0
    %s25 = sadd.s32 %s24, 1
    %s26 = scalar_select %p23, %s24, %s25
    %p29 = pneg %p23
    %p30 = scmp.eq.s32.totalorder %s14, 1
    %p31 = por %p29, %p30
    %p32 = scmp.ne.s32.totalorder %s24, %s27
    %p33 = scmp.eq.s32.totalorder %s14, 0
    %p34 = por %p32, %p33
    %p35 = scmp.ne.s32.totalorder %s24, %s27
    %p36 = scmp.eq.s32.totalorder %s19, 1
    %p37 = por %p35, %p36
    %p38 = scmp.ne.s32.totalorder %s27, %s28
    %p39 = scmp.eq.s32.totalorder %s19, 0
    %p40 = por %p38, %p39
    %p41 = scmp.ne.s32.totalorder %s27, %s28
    %p42 = scmp.eq.s32.totalorder %s20, 1
    %p43 = por %p41, %p42
    %p45 = scmp.ne.s32.totalorder %s28, %s44
    %p46 = scmp.eq.s32.totalorder %s20, 0
    %p47 = por %p45, %p46
    %s49 = sadd.s32 %s48, 1
    %p52 = scmp.eq.s32.totalorder %s14, 1
    %p53 = scmp.ne.s32.totalorder %s48, %s50
    %p54 = scmp.eq.s32.totalorder %s14, 0
    %p55 = por %p53, %p54
    %p56 = scmp.ne.s32.totalorder %s48, %s50
    %p57 = scmp.eq.s32.totalorder %s19, 1
    %p58 = por %p56, %p57
    %p59 = scmp.ne.s32.totalorder %s50, %s51
    %p60 = scmp.eq.s32.totalorder %s19, 0
    %p61 = por %p59, %p60
    %p62 = scmp.ne.s32.totalorder %s50, %s51
    %p63 = scmp.eq.s32.totalorder %s20, 1
    %p64 = por %p62, %p63
    %p66 = scmp.ne.s32.totalorder %s51, %s65
    %p67 = scmp.eq.s32.totalorder %s20, 0
    %p68 = por %p66, %p67
    %s70 = sadd.s32 %s69, 1
    %p73 = scmp.eq.s32.totalorder %s14, 1
    %p74 = scmp.ne.s32.totalorder %s69, %s71
    %p75 = scmp.eq.s32.totalorder %s14, 0
    %p76 = por %p74, %p75
    %p77 = scmp.ne.s32.totalorder %s69, %s71
    %p78 = scmp.eq.s32.totalorder %s19, 1
    %p79 = por %p77, %p78
    %p80 = scmp.ne.s32.totalorder %s71, %s72
    %p81 = scmp.eq.s32.totalorder %s19, 0
    %p82 = por %p80, %p81
    %p83 = scmp.ne.s32.totalorder %s71, %s72
    %p84 = scmp.eq.s32.totalorder %s20, 1
    %p85 = por %p83, %p84
    %p87 = scmp.ne.s32.totalorder %s72, %s86
    %p88 = scmp.eq.s32.totalorder %s20, 0
    %p89 = por %p87, %p88
    %s91 = sadd.s32 %s90, 1
    %p94 = scmp.eq.s32.totalorder %s14, 1
    %p95 = scmp.ne.s32.totalorder %s90, %s92
    %p96 = scmp.eq.s32.totalorder %s14, 0
    %p97 = por %p95, %p96
    %p98 = scmp.ne.s32.totalorder %s90, %s92
    %p99 = scmp.eq.s32.totalorder %s19, 1
    %p100 = por %p98, %p99
    %p101 = scmp.ne.s32.totalorder %s92, %s93
    %p102 = scmp.eq.s32.totalorder %s19, 0
    %p103 = por %p101, %p102
    %p104 = scmp.ne.s32.totalorder %s92, %s93
    %p105 = scmp.eq.s32.totalorder %s20, 1
    %p106 = por %p104, %p105
    %p108 = scmp.ne.s32.totalorder %s93, %s107
    %p109 = scmp.eq.s32.totalorder %s20, 0
    %p110 = por %p108, %p109
    %s112 = sadd.s32 %s111, 1
    %p115 = scmp.eq.s32.totalorder %s14, 1
    %p116 = scmp.ne.s32.totalorder %s111, %s113
    %p117 = scmp.eq.s32.totalorder %s14, 0
    %p118 = por %p116, %p117
    %p119 = scmp.ne.s32.totalorder %s111, %s113
    %p120 = scmp.eq.s32.totalorder %s19, 1
    %p121 = por %p119, %p120
    %p122 = scmp.ne.s32.totalorder %s113, %s114
    %p123 = scmp.eq.s32.totalorder %s19, 0
    %p124 = por %p122, %p123
    %p125 = scmp.ne.s32.totalorder %s113, %s114
    %p126 = scmp.eq.s32.totalorder %s20, 1
    %p127 = por %p125, %p126
    %p129 = scmp.ne.s32.totalorder %s114, %s128
    %p130 = scmp.eq.s32.totalorder %s20, 0
    %p131 = por %p129, %p130
    %s133 = sadd.s32 %s132, 1
    %p136 = scmp.eq.s32.totalorder %s14, 1
    %p137 = scmp.ne.s32.totalorder %s132, %s134
    %p138 = scmp.eq.s32.totalorder %s14, 0
    %p139 = por %p137, %p138
    %p140 = scmp.ne.s32.totalorder %s132, %s134
    %p141 = scmp.eq.s32.totalorder %s19, 1
    %p142 = por %p140, %p141
    %p143 = scmp.ne.s32.totalorder %s134, %s135
    %p144 = scmp.eq.s32.totalorder %s19, 0
    %p145 = por %p143, %p144
    %p146 = scmp.ne.s32.totalorder %s134, %s135
    %p147 = scmp.eq.s32.totalorder %s20, 1
    %p148 = por %p146, %p147
    %p150 = scmp.ne.s32.totalorder %s135, %s149
    %p151 = scmp.eq.s32.totalorder %s20, 0
    %p152 = por %p150, %p151
    %s154 = sadd.s32 %s153, 1
    %p157 = scmp.eq.s32.totalorder %s14, 1
    %p158 = scmp.ne.s32.totalorder %s153, %s155
    %p159 = scmp.eq.s32.totalorder %s14, 0
    %p160 = por %p158, %p159
    %p161 = scmp.ne.s32.totalorder %s153, %s155
    %p162 = scmp.eq.s32.totalorder %s19, 1
    %p163 = por %p161, %p162
    %p164 = scmp.ne.s32.totalorder %s155, %s156
    %p165 = scmp.eq.s32.totalorder %s19, 0
    %p166 = por %p164, %p165
    %p167 = scmp.ne.s32.totalorder %s155, %s156
    %p168 = scmp.eq.s32.totalorder %s20, 1
    %p169 = por %p167, %p168
    %p171 = scmp.ne.s32.totalorder %s156, %s170
    %p172 = scmp.eq.s32.totalorder %s20, 0
    %p173 = por %p171, %p172
    %s175 = sadd.s32 %s174, 1
    %p178 = scmp.eq.s32.totalorder %s14, 1
    %p179 = scmp.ne.s32.totalorder %s174, %s176
    %p180 = scmp.eq.s32.totalorder %s14, 0
    %p181 = por %p179, %p180
    %p182 = scmp.ne.s32.totalorder %s174, %s176
    %p183 = scmp.eq.s32.totalorder %s19, 1
    %p184 = por %p182, %p183
    %p185 = scmp.ne.s32.totalorder %s176, %s177
    %p186 = scmp.eq.s32.totalorder %s19, 0
    %p187 = por %p185, %p186
    %p188 = scmp.ne.s32.totalorder %s176, %s177
    %p189 = scmp.eq.s32.totalorder %s20, 1
    %p190 = por %p188, %p189
    %p192 = scmp.ne.s32.totalorder %s177, %s191
    %p193 = scmp.eq.s32.totalorder %s20, 0
    %p194 = por %p192, %p193
    %s195 = ssub.s32 %s14, %s21
    %p196 = scmp.eq.s32.totalorder %s195, 0
    %s198 = sadd.s32 %s197, 1
    %s199 = scalar_select %p196, %s197, %s198
    %p202 = pneg %p196
    %p203 = scmp.eq.s32.totalorder %s14, 1
    %p204 = por %p202, %p203
    %p205 = scmp.ne.s32.totalorder %s197, %s200
    %p206 = scmp.eq.s32.totalorder %s14, 0
    %p207 = por %p205, %p206
    %p208 = scmp.ne.s32.totalorder %s197, %s200
    %p209 = scmp.eq.s32.totalorder %s19, 1
    %p210 = por %p208, %p209
    %p211 = scmp.ne.s32.totalorder %s200, %s201
    %p212 = scmp.eq.s32.totalorder %s19, 0
    %p213 = por %p211, %p212
    %p214 = scmp.ne.s32.totalorder %s200, %s201
    %p215 = scmp.eq.s32.totalorder %s20, 1
    %p216 = por %p214, %p215
    %p218 = scmp.ne.s32.totalorder %s201, %s217
    %p219 = scmp.eq.s32.totalorder %s20, 0
    %p220 = por %p218, %p219
    %p221 = scmp.le.s32.totalorder 1, %s14
    %p222 = scmp.lt.s32.totalorder %s14, 3
    %p223 = pnand %p221, %p222
    %p224 = pneg %p223
    // Predicated region
    $region9: #{attention_forward.1} parent=5 // pred_check
      _
    $region10: #{attention_forward.1} parent=5 // pred_check_branch
      %226 = sbr.rel (%p223) target = $region12
    $region11: #{attention_forward.1} parent=5 // pred_region
      %s227 = ssub.s32 %s14, 1
      // Predicated region
      $region13: #{attention_forward.1} parent=11 // pred_check
        %p228 = pneg %p61
      $region14: #{attention_forward.1} parent=11 // pred_check_branch
        %230 = sbr.rel (%p228) target = $region16
      $region15: #{attention_forward.1} parent=11 // pred_region
        _
      $region16: #{attention_forward.1} parent=11 // pred_fallthru
        _
      // Predicated region
      $region17: #{attention_forward.1} parent=11 // pred_check
        %p231 = pneg %p82
      $region18: #{attention_forward.1} parent=11 // pred_check_branch
        %233 = sbr.rel (%p231) target = $region20
      $region19: #{attention_forward.1} parent=11 // pred_region
        _
      $region20: #{attention_forward.1} parent=11 // pred_fallthru
        _
      // Predicated region
      $region21: #{attention_forward.1} parent=11 // pred_check
        %p234 = pneg %p103
      $region22: #{attention_forward.1} parent=11 // pred_check_branch
        %236 = sbr.rel (%p234) target = $region24
      $region23: #{attention_forward.1} parent=11 // pred_region
        _
      $region24: #{attention_forward.1} parent=11 // pred_fallthru
        _
      // Predicated region
      $region25: #{attention_forward.1} parent=11 // pred_check
        %p237 = pneg %p124
      $region26: #{attention_forward.1} parent=11 // pred_check_branch
        %239 = sbr.rel (%p237) target = $region28
      $region27: #{attention_forward.1} parent=11 // pred_region
        _
      $region28: #{attention_forward.1} parent=11 // pred_fallthru
        _
      // Predicated region
      $region29: #{attention_forward.1} parent=11 // pred_check
        %p240 = pneg %p145
      $region30: #{attention_forward.1} parent=11 // pred_check_branch
        %242 = sbr.rel (%p240) target = $region32
      $region31: #{attention_forward.1} parent=11 // pred_region
        _
      $region32: #{attention_forward.1} parent=11 // pred_fallthru
        _
      // Predicated region
      $region33: #{attention_forward.1} parent=11 // pred_check
        %p243 = pneg %p166
      $region34: #{attention_forward.1} parent=11 // pred_check_branch
        %245 = sbr.rel (%p243) target = $region36
      $region35: #{attention_forward.1} parent=11 // pred_region
        _
      $region36: #{attention_forward.1} parent=11 // pred_fallthru
        _
      // Predicated region
      $region37: #{attention_forward.1} parent=11 // pred_check
        %p246 = pneg %p187
      $region38: #{attention_forward.1} parent=11 // pred_check_branch
        %248 = sbr.rel (%p246) target = $region40
      $region39: #{attention_forward.1} parent=11 // pred_region
        _
      $region40: #{attention_forward.1} parent=11 // pred_fallthru
        _
    $region12: #{attention_forward.1} parent=5 // pred_fallthru
      _
    %p249 = scmp.lt.s32.totalorder %s14, 2
    // Predicated region
    $region41: #{attention_forward.1} parent=5 // pred_check
      %p250 = pneg %p249
    $region42: #{attention_forward.1} parent=5 // pred_check_branch
      %252 = sbr.rel (%p250) target = $region44
    $region43: #{attention_forward.1} parent=5 // pred_region
      // Predicated region
      $region45: #{attention_forward.1} parent=43 // pred_check
        %p253 = pneg %p34
      $region46: #{attention_forward.1} parent=43 // pred_check_branch
        %255 = sbr.rel (%p253) target = $region48
      $region47: #{attention_forward.1} parent=43 // pred_region
        %p256 = scmp.lt.s32.totalorder %s14, 1
        %s257 = scalar_select %p256, %s14, 1
        %s258 = smul.addr %s257, 4
        %s259 = smul.addr %s258, 8
        %s260 = scalar_lea.vmem %s0, %s259
      $region48: #{attention_forward.1} parent=43 // pred_fallthru
        _
    $region44: #{attention_forward.1} parent=5 // pred_fallthru
      _
    %p261 = scmp.le.s32.totalorder 1, %s14
    %p262 = scmp.lt.s32.totalorder %s14, 3
    %p263 = pnand %p261, %p262
    %p264 = pneg %p263
    // Predicated region
    $region49: #{attention_forward.1} parent=5 // pred_check
      _
    $region50: #{attention_forward.1} parent=5 // pred_check_branch
      %266 = sbr.rel (%p263) target = $region52
    $region51: #{attention_forward.1} parent=5 // pred_region
      %s267 = ssub.s32 %s14, 1
      %p268 = scmp.lt.s32.totalorder %s19, 1
      %s269 = scalar_select %p268, %s19, 1
      %s270 = smul.addr %s269, 4
      %s271 = smul.addr %s270, 8
      %s272 = scalar_lea.vmem %s0, %s271
      %p273 = pneg %p40
      %p274 = pneg %p37
      %p275 = pneg %p61
      %p276 = pneg %p58
      %p277 = pneg %p82
      %p278 = pneg %p79
      %p279 = pneg %p103
      %p280 = pneg %p100
      %p281 = pneg %p124
      %p282 = pneg %p121
      %p283 = pneg %p145
      %p284 = pneg %p142
      %p285 = pneg %p166
      %p286 = pneg %p163
      %p287 = pneg %p187
      %p288 = pneg %p184
      %p289 = pneg %p213
      %p290 = pneg %p210
      %p291 = scmp.lt.s32.totalorder %s19, 1
      %s292 = scalar_select %p291, %s19, 1
      %s293 = smul.addr %s292, 4
      %s294 = smul.addr %s293, 8
      %s295 = scalar_lea.vmem %s8, %s294
      %p296 = scmp.lt.s32.totalorder %s19, 1
      %s297 = scalar_select %p296, %s19, 1
      %s298 = smul.addr %s297, 4
      %s299 = smul.addr %s298, 8
      %s300 = scalar_lea.vmem %s0, %s299
      %p301 = scmp.lt.s32.totalorder %s19, 1
      %s302 = scalar_select %p301, %s19, 1
      %s303 = smul.addr %s302, 4
      %s304 = smul.addr %s303, 8
      %s305 = scalar_lea.vmem %s8, %s304
      %v307 = vld [vmem:[%s300] sm:$0xff]
      %v308 = vld [vmem:[%s300 + $0x8] sm:$0xff]
      %v309 = vld [vmem:[%s300 + $0x10] sm:$0xff]
      %v310 = vld [vmem:[%s300 + $0x18] sm:$0xff]
      %v311 = vpack.c.bf16 %v308, %v307
      %v312 = vpack.c.bf16 %v310, %v309
      %v313 = vld [vmem:[%s1] sm:$0xf]
      %v314 = vld [vmem:[%s1 + $0x4] sm:$0xf]
      %v315 = vld [vmem:[%s1 + $0x8] sm:$0xf]
      %v316 = vld [vmem:[%s1 + $0xc] sm:$0xf]
      %v321 = vunpack.c.l.b16 %v313
      %v322 = vunpack.c.l.b16 %v314
      %v323 = vunpack.c.l.b16 %v315
      %v324 = vunpack.c.l.b16 %v316
      %v325 = vpack.c.b16 %v322, %v321
      %v326 = vpack.c.b16 %v324, %v323
      %vm327 = vcmask 523264
      %v329 = vsel %vm327, %v325, 0
      %v332 = vsel %vm327, %v326, 0
      %v335 = vsel %vm327, %v311, 0
      %v338 = vsel %vm327, %v312, 0
      %340 = vmatprep.subr.bf16.mxu0 0
      %341 = vmatpush1.bf16.xpose.msra.mxu0 0
      %342 = vmatprep.subr.bf16.mxu0 0
      %343 = vmatpush1.bf16.xpose.msra.mxu0 0
      %344 = vmatprep.subr.bf16.mxu0 0
      %345 = vmatpush1.bf16.xpose.msra.mxu0 0
      %346 = vmatprep.subr.bf16.mxu0 0
      %347 = vmatpush1.bf16.xpose.msra.mxu0 0
      %348 = vmatprep.subr.bf16.mxu0 0
      %349 = vmatpush1.bf16.xpose.msra.mxu0 0
      %350 = vmatprep.subr.bf16.mxu0 0
      %351 = vmatpush1.bf16.xpose.msra.mxu0 0
      %352 = vmatprep.subr.bf16.mxu0 0
      %353 = vmatpush1.bf16.xpose.msra.mxu0 %v338
      %354 = vmatprep.subr.bf16.mxu0 0
      %355 = vmatpush1.bf16.xpose.msra.mxu0 %v335
      %356 = vmatprep.subr.bf16.mxu0 0
      %357 = vmatpush2.bf16.xpose.msra.mxu0 0
      %358 = vmatprep.subr.bf16.mxu0 0
      %359 = vmatpush2.bf16.xpose.msra.mxu0 0
      %360 = vmatprep.subr.bf16.mxu0 0
      %361 = vmatpush2.bf16.xpose.msra.mxu0 0
      %362 = vmatprep.subr.bf16.mxu0 0
      %363 = vmatpush2.bf16.xpose.msra.mxu0 0
      %364 = vmatprep.subr.bf16.mxu0 0
      %365 = vmatpush2.bf16.xpose.msra.mxu0 0
      %366 = vmatprep.subr.bf16.mxu0 0
      %367 = vmatpush2.bf16.xpose.msra.mxu0 0
      %368 = vmatprep.subr.bf16.mxu0 0
      %369 = vmatpush2.bf16.xpose.msra.mxu0 0
      %370 = vmatprep.subr.bf16.mxu0 0
      %371 = vmatpush2.bf16.xpose.msra.mxu0 0
      %372 = vmatprep.mubr.bf16.mxu0 0
      %373 = vmatmul.mubr.bf16.gmra.mxu0 %v329
      %v374 = vpop.f32.mrf.mxu0
      %v375 = vadd.f32 0.0, %v374
      %v376 = vpop.f32.mrf.mxu0
      %v377 = vpop.f32.mrf.mxu0
      %v378 = vadd.f32 0.0, %v377
      %v379 = vpop.f32.mrf.mxu0
      %380 = vmatprep.mubr.bf16.mxu0 0
      %381 = vmatmul.mubr.bf16.gmra.mxu0 %v332
      %v382 = vpop.f32.mrf.mxu0
      %v383 = vadd.f32 0.0, %v382
      %v384 = vpop.f32.mrf.mxu0
      %v385 = vpop.f32.mrf.mxu0
      %v386 = vadd.f32 0.0, %v385
      %v387 = vpop.f32.mrf.mxu0
      %388 = vdwg.mxu0
      %v389 = vpack.c.bf16 %v378, %v375
      %v390 = vpack.c.bf16 %v386, %v383
      %v391 = vld [vmem:[%s2] sm:$0xf]
      %v392 = vld [vmem:[%s2 + $0x4] sm:$0xf]
      %v393 = vld [vmem:[%s2 + $0x8] sm:$0xf]
      %v394 = vld [vmem:[%s2 + $0xc] sm:$0xf]
      %v399 = vunpack.c.l.b16 %v391
      %v400 = vunpack.c.l.b16 %v392
      %v401 = vunpack.c.l.b16 %v393
      %v402 = vunpack.c.l.b16 %v394
      %v403 = vpack.c.b16 %v400, %v399
      %v404 = vpack.c.b16 %v402, %v401
      %vm405 = vcmask 261120
      %v407 = vsel %vm405, %v403, 0
      %v410 = vsel %vm405, %v404, 0
      %412 = vmatprep.subr.bf16.mxu0 0
      %413 = vmatpush1.bf16.msra.mxu0 0
      %414 = vmatprep.subr.bf16.mxu0 0
      %415 = vmatpush1.bf16.msra.mxu0 0
      %416 = vmatprep.subr.bf16.mxu0 0
      %417 = vmatpush1.bf16.msra.mxu0 0
      %418 = vmatprep.subr.bf16.mxu0 0
      %419 = vmatpush1.bf16.msra.mxu0 0
      %420 = vmatprep.subr.bf16.mxu0 0
      %421 = vmatpush1.bf16.msra.mxu0 0
      %422 = vmatprep.subr.bf16.mxu0 0
      %423 = vmatpush1.bf16.msra.mxu0 0
      %424 = vmatprep.subr.bf16.mxu0 0
      %425 = vmatpush1.bf16.msra.mxu0 %v312
      %426 = vmatprep.subr.bf16.mxu0 0
      %427 = vmatpush1.bf16.msra.mxu0 %v311
      %428 = vmatprep.subr.bf16.mxu0 0
      %429 = vmatpush2.bf16.msra.mxu0 0
      %430 = vmatprep.subr.bf16.mxu0 0
      %431 = vmatpush2.bf16.msra.mxu0 0
      %432 = vmatprep.subr.bf16.mxu0 0
      %433 = vmatpush2.bf16.msra.mxu0 0
      %434 = vmatprep.subr.bf16.mxu0 0
      %435 = vmatpush2.bf16.msra.mxu0 0
      %436 = vmatprep.subr.bf16.mxu0 0
      %437 = vmatpush2.bf16.msra.mxu0 0
      %438 = vmatprep.subr.bf16.mxu0 0
      %439 = vmatpush2.bf16.msra.mxu0 0
      %440 = vmatprep.subr.bf16.mxu0 0
      %441 = vmatpush2.bf16.msra.mxu0 0
      %442 = vmatprep.subr.bf16.mxu0 0
      %443 = vmatpush2.bf16.msra.mxu0 0
      %444 = vmatprep.mubr.bf16.mxu0 0
      %445 = vmatmul.mubr.bf16.gmra.mxu0 %v407
      %v446 = vpop.f32.mrf.mxu0
      %v447 = vadd.f32 0.0, %v446
      %v448 = vpop.f32.mrf.mxu0
      %v449 = vpop.f32.mrf.mxu0
      %v450 = vadd.f32 0.0, %v449
      %v451 = vpop.f32.mrf.mxu0
      %452 = vmatprep.mubr.bf16.mxu0 0
      %453 = vmatmul.mubr.bf16.gmra.mxu0 %v410
      %v454 = vpop.f32.mrf.mxu0
      %v455 = vadd.f32 0.0, %v454
      %v456 = vpop.f32.mrf.mxu0
      %v457 = vpop.f32.mrf.mxu0
      %v458 = vadd.f32 0.0, %v457
      %v459 = vpop.f32.mrf.mxu0
      %460 = vdwg.mxu0
      %461 = vst.msk [vmem:[#allocation2] sm:$0xff] %vm327, %v447
      %462 = vst.msk [vmem:[#allocation2 + $0x8] sm:$0xff] %vm327, %v450
      %463 = vst.msk [vmem:[#allocation2 + $0x10] sm:$0xff] %vm327, %v455
      %464 = vst.msk [vmem:[#allocation2 + $0x18] sm:$0xff] %vm327, %v458
      %v465 = vld [vmem:[%s3] sm:$0xf]
      %v466 = vld [vmem:[%s3 + $0x4] sm:$0xf]
      %v467 = vld [vmem:[%s3 + $0x8] sm:$0xf]
      %v468 = vld [vmem:[%s3 + $0xc] sm:$0xf]
      %v473 = vunpack.c.l.b16 %v465
      %v474 = vunpack.c.l.b16 %v466
      %v475 = vunpack.c.l.b16 %v467
      %v476 = vunpack.c.l.b16 %v468
      %v477 = vpack.c.b16 %v474, %v473
      %v478 = vpack.c.b16 %v476, %v475
      %v482 = vsel %vm405, %v389, 0
      %v485 = vsel %vm405, %v390, 0
      %487 = vmatprep.subr.bf16.mxu0 0
      %488 = vmatpush1.bf16.msra.mxu0 0
      %489 = vmatprep.subr.bf16.mxu0 0
      %490 = vmatpush1.bf16.msra.mxu0 0
      %491 = vmatprep.subr.bf16.mxu0 0
      %492 = vmatpush1.bf16.msra.mxu0 0
      %493 = vmatprep.subr.bf16.mxu0 0
      %494 = vmatpush1.bf16.msra.mxu0 0
      %495 = vmatprep.subr.bf16.mxu0 0
      %496 = vmatpush1.bf16.msra.mxu0 0
      %497 = vmatprep.subr.bf16.mxu0 0
      %498 = vmatpush1.bf16.msra.mxu0 0
      %499 = vmatprep.subr.bf16.mxu0 0
      %500 = vmatpush1.bf16.msra.mxu0 %v478
      %501 = vmatprep.subr.bf16.mxu0 0
      %502 = vmatpush1.bf16.msra.mxu0 %v477
      %503 = vmatprep.subr.bf16.mxu0 0
      %504 = vmatpush2.bf16.msra.mxu0 0
      %505 = vmatprep.subr.bf16.mxu0 0
      %506 = vmatpush2.bf16.msra.mxu0 0
      %507 = vmatprep.subr.bf16.mxu0 0
      %508 = vmatpush2.bf16.msra.mxu0 0
      %509 = vmatprep.subr.bf16.mxu0 0
      %510 = vmatpush2.bf16.msra.mxu0 0
      %511 = vmatprep.subr.bf16.mxu0 0
      %512 = vmatpush2.bf16.msra.mxu0 0
      %513 = vmatprep.subr.bf16.mxu0 0
      %514 = vmatpush2.bf16.msra.mxu0 0
      %515 = vmatprep.subr.bf16.mxu0 0
      %516 = vmatpush2.bf16.msra.mxu0 0
      %517 = vmatprep.subr.bf16.mxu0 0
      %518 = vmatpush2.bf16.msra.mxu0 0
      %519 = vmatprep.mubr.bf16.mxu0 0
      %520 = vmatmul.mubr.bf16.gmra.mxu0 %v482
      %v521 = vpop.f32.mrf.mxu0
      %v522 = vadd.f32 0.0, %v521
      %v523 = vpop.f32.mrf.mxu0
      %v524 = vpop.f32.mrf.mxu0
      %v525 = vadd.f32 0.0, %v524
      %v526 = vpop.f32.mrf.mxu0
      %527 = vmatprep.mubr.bf16.mxu0 0
      %528 = vmatmul.mubr.bf16.gmra.mxu0 %v485
      %v529 = vpop.f32.mrf.mxu0
      %v530 = vadd.f32 0.0, %v529
      %v531 = vpop.f32.mrf.mxu0
      %v532 = vpop.f32.mrf.mxu0
      %v533 = vadd.f32 0.0, %v532
      %v534 = vpop.f32.mrf.mxu0
      %535 = vdwg.mxu0
      %v536 = vxor.u32 %v522, 2147483648
      %v537 = vxor.u32 %v525, 2147483648
      %v538 = vxor.u32 %v530, 2147483648
      %v539 = vxor.u32 %v533, 2147483648
      %v540 = vmul.f32 %v536, 1.442695
      %v541 = vpow.pop %v540
      %v542 = vmul.f32 %v537, 1.442695
      %v543 = vpow.pop %v542
      %v544 = vmul.f32 %v538, 1.442695
      %v545 = vpow.pop %v544
      %v546 = vmul.f32 %v539, 1.442695
      %v547 = vpow.pop %v546
      %v548 = vadd.f32 %v541, 1.0
      %v549 = vadd.f32 %v543, 1.0
      %v550 = vadd.f32 %v545, 1.0
      %v551 = vadd.f32 %v547, 1.0
      %v552 = vrcp.pop %v548
      %v553 = vmul.f32 1.0, %v552
      %v554 = vrcp.pop %v549
      %v555 = vmul.f32 1.0, %v554
      %v556 = vrcp.pop %v550
      %v557 = vmul.f32 1.0, %v556
      %v558 = vrcp.pop %v551
      %v559 = vmul.f32 1.0, %v558
      %560 = vst.msk [vmem:[#allocation3] sm:$0xff] %vm405, %v553
      %561 = vst.msk [vmem:[#allocation3 + $0x8] sm:$0xff] %vm405, %v555
      %562 = vst.msk [vmem:[#allocation3 + $0x10] sm:$0xff] %vm405, %v557
      %563 = vst.msk [vmem:[#allocation3 + $0x18] sm:$0xff] %vm405, %v559
      %v564 = vld [vmem:[%s4] sm:$0xf]
      %v565 = vld [vmem:[%s4 + $0x4] sm:$0xf]
      %v566 = vld [vmem:[%s4 + $0x8] sm:$0xf]
      %v567 = vld [vmem:[%s4 + $0xc] sm:$0xf]
      %v572 = vunpack.c.l.b16 %v564
      %v573 = vunpack.c.l.b16 %v565
      %v574 = vunpack.c.l.b16 %v566
      %v575 = vunpack.c.l.b16 %v567
      %v576 = vpack.c.b16 %v573, %v572
      %v577 = vpack.c.b16 %v575, %v574
      %v579 = vsel %vm405, %v576, 0
      %v582 = vsel %vm405, %v577, 0
      %584 = vmatprep.subr.bf16.mxu0 0
      %585 = vmatpush1.bf16.xpose.msra.mxu0 0
      %586 = vmatprep.subr.bf16.mxu0 0
      %587 = vmatpush1.bf16.xpose.msra.mxu0 0
      %588 = vmatprep.subr.bf16.mxu0 0
      %589 = vmatpush1.bf16.xpose.msra.mxu0 0
      %590 = vmatprep.subr.bf16.mxu0 0
      %591 = vmatpush1.bf16.xpose.msra.mxu0 0
      %592 = vmatprep.subr.bf16.mxu0 0
      %593 = vmatpush1.bf16.xpose.msra.mxu0 0
      %594 = vmatprep.subr.bf16.mxu0 0
      %595 = vmatpush1.bf16.xpose.msra.mxu0 0
      %596 = vmatprep.subr.bf16.mxu0 0
      %597 = vmatpush1.bf16.xpose.msra.mxu0 %v485
      %598 = vmatprep.subr.bf16.mxu0 0
      %599 = vmatpush1.bf16.xpose.msra.mxu0 %v482
      %600 = vmatprep.subr.bf16.mxu0 0
      %601 = vmatpush2.bf16.xpose.msra.mxu0 0
      %602 = vmatprep.subr.bf16.mxu0 0
      %603 = vmatpush2.bf16.xpose.msra.mxu0 0
      %604 = vmatprep.subr.bf16.mxu0 0
      %605 = vmatpush2.bf16.xpose.msra.mxu0 0
      %606 = vmatprep.subr.bf16.mxu0 0
      %607 = vmatpush2.bf16.xpose.msra.mxu0 0
      %608 = vmatprep.subr.bf16.mxu0 0
      %609 = vmatpush2.bf16.xpose.msra.mxu0 0
      %610 = vmatprep.subr.bf16.mxu0 0
      %611 = vmatpush2.bf16.xpose.msra.mxu0 0
      %612 = vmatprep.subr.bf16.mxu0 0
      %613 = vmatpush2.bf16.xpose.msra.mxu0 0
      %614 = vmatprep.subr.bf16.mxu0 0
      %615 = vmatpush2.bf16.xpose.msra.mxu0 0
      %616 = vmatprep.mubr.bf16.mxu0 0
      %617 = vmatmul.mubr.bf16.gmra.mxu0 %v579
      %v618 = vpop.f32.mrf.mxu0
      %v619 = vadd.f32 0.0, %v618
      %v620 = vpop.f32.mrf.mxu0
      %v621 = vpop.f32.mrf.mxu0
      %v622 = vadd.f32 0.0, %v621
      %v623 = vpop.f32.mrf.mxu0
      %624 = vmatprep.mubr.bf16.mxu0 0
      %625 = vmatmul.mubr.bf16.gmra.mxu0 %v582
      %v626 = vpop.f32.mrf.mxu0
      %v627 = vadd.f32 0.0, %v626
      %v628 = vpop.f32.mrf.mxu0
      %v629 = vpop.f32.mrf.mxu0
      %v630 = vadd.f32 0.0, %v629
      %v631 = vpop.f32.mrf.mxu0
      %632 = vdwg.mxu0
      %v633 = vxor.u32 %v619, 2147483648
      %v634 = vxor.u32 %v622, 2147483648
      %v635 = vxor.u32 %v627, 2147483648
      %v636 = vxor.u32 %v630, 2147483648
      %v637 = vmul.f32 %v633, 1.442695
      %v638 = vpow.pop %v637
      %v639 = vmul.f32 %v634, 1.442695
      %v640 = vpow.pop %v639
      %v641 = vmul.f32 %v635, 1.442695
      %v642 = vpow.pop %v641
      %v643 = vmul.f32 %v636, 1.442695
      %v644 = vpow.pop %v643
      %v645 = vadd.f32 %v638, 1.0
      %v646 = vadd.f32 %v640, 1.0
      %v647 = vadd.f32 %v642, 1.0
      %v648 = vadd.f32 %v644, 1.0
      %v649 = vrcp.pop %v645
      %v650 = vmul.f32 1.0, %v649
      %v651 = vrcp.pop %v646
      %v652 = vmul.f32 1.0, %v651
      %v653 = vrcp.pop %v647
      %v654 = vmul.f32 1.0, %v653
      %v655 = vrcp.pop %v648
      %v656 = vmul.f32 1.0, %v655
      %657 = vst.msk [vmem:[#allocation4] sm:$0xff] %vm405, %v650
      %658 = vst.msk [vmem:[#allocation4 + $0x8] sm:$0xff] %vm405, %v652
      %659 = vst.msk [vmem:[#allocation4 + $0x10] sm:$0xff] %vm405, %v654
      %660 = vst.msk [vmem:[#allocation4 + $0x18] sm:$0xff] %vm405, %v656
      %v661 = vld [vmem:[%s7] sm:$0xff]
      %v662 = vld [vmem:[%s7 + $0x8] sm:$0xff]
      %v663 = vld [vmem:[%s7 + $0x10] sm:$0xff]
      %v664 = vld [vmem:[%s7 + $0x18] sm:$0xff]
      %v665 = vld [vmem:[#allocation2] sm:$0xff]
      %v666 = vpack.c.bf16 %v665, %v665
      %v667 = vld [vmem:[#allocation3] sm:$0xff]
      %v668 = vld [vmem:[#allocation3 + $0x8] sm:$0xff]
      %v669 = vld [vmem:[#allocation3 + $0x10] sm:$0xff]
      %v670 = vld [vmem:[#allocation3 + $0x18] sm:$0xff]
      %v671 = vpack.c.bf16 %v668, %v667
      %v672 = vpack.c.bf16 %v670, %v669
      %v673 = vld [vmem:[#allocation4] sm:$0xff]
      %v674 = vpack.c.bf16 %v673, %v673
      %vm675 = vcmask 64512
      %v677 = vsel %vm675, %v671, 0
      %v680 = vsel %vm675, %v672, 0
      %vm682 = vcmask 1043456
      %v684 = vsel %vm682, %v666, 0
      %686 = vmatprep.subr.bf16.mxu0 0
      %687 = vmatpush1.bf16.msra.mxu0 0
      %688 = vmatprep.subr.bf16.mxu0 0
      %689 = vmatpush1.bf16.msra.mxu0 0
      %690 = vmatprep.subr.bf16.mxu0 0
      %691 = vmatpush1.bf16.msra.mxu0 0
      %692 = vmatprep.subr.bf16.mxu0 0
      %693 = vmatpush1.bf16.msra.mxu0 0
      %694 = vmatprep.subr.bf16.mxu0 0
      %695 = vmatpush1.bf16.msra.mxu0 0
      %696 = vmatprep.subr.bf16.mxu0 0
      %697 = vmatpush1.bf16.msra.mxu0 0
      %698 = vmatprep.subr.bf16.mxu0 0
      %699 = vmatpush1.bf16.msra.mxu0 0
      %700 = vmatprep.subr.bf16.mxu0 0
      %701 = vmatpush1.bf16.msra.mxu0 %v684
      %702 = vmatprep.subr.bf16.mxu0 0
      %703 = vmatpush2.bf16.msra.mxu0 0
      %704 = vmatprep.subr.bf16.mxu0 0
      %705 = vmatpush2.bf16.msra.mxu0 0
      %706 = vmatprep.subr.bf16.mxu0 0
      %707 = vmatpush2.bf16.msra.mxu0 0
      %708 = vmatprep.subr.bf16.mxu0 0
      %709 = vmatpush2.bf16.msra.mxu0 0
      %710 = vmatprep.subr.bf16.mxu0 0
      %711 = vmatpush2.bf16.msra.mxu0 0
      %712 = vmatprep.subr.bf16.mxu0 0
      %713 = vmatpush2.bf16.msra.mxu0 0
      %714 = vmatprep.subr.bf16.mxu0 0
      %715 = vmatpush2.bf16.msra.mxu0 0
      %716 = vmatprep.subr.bf16.mxu0 0
      %717 = vmatpush2.bf16.msra.mxu0 0
      %718 = vmatprep.mubr.bf16.mxu0 0
      %719 = vmatmul.mubr.bf16.gmra.mxu0 %v677
      %v720 = vpop.f32.mrf.mxu0
      %v721 = vadd.f32 %v661, %v720
      %v722 = vpop.f32.mrf.mxu0
      %v723 = vpop.f32.mrf.mxu0
      %v724 = vadd.f32 %v662, %v723
      %v725 = vpop.f32.mrf.mxu0
      %726 = vmatprep.mubr.bf16.mxu0 0
      %727 = vmatmul.mubr.bf16.gmra.mxu0 %v680
      %v728 = vpop.f32.mrf.mxu0
      %v729 = vadd.f32 %v663, %v728
      %v730 = vpop.f32.mrf.mxu0
      %v731 = vpop.f32.mrf.mxu0
      %v732 = vadd.f32 %v664, %v731
      %v733 = vpop.f32.mrf.mxu0
      %734 = vdwg.mxu0
      %v735 = vsel %vm327, %v721, -inf
      %v736 = vsel %vm327, %v724, -inf
      %v737 = vsel %vm327, %v729, -inf
      %v738 = vsel %vm327, %v732, -inf
      %v739 = vmax.f32 %v735, %v736
      %v740 = vmax.f32 %v737, %v738
      %v741 = vmax.f32 %v739, %v740
      %v742 = vrot.slane %v741, 4
      %v743 = vmax.f32 %v741, %v742
      %v744 = vrot.slane %v743, 2
      %v745 = vmax.f32 %v743, %v744
      %v746 = vrot.slane %v745, 1
      %v747 = vmax.f32 %v745, %v746
      %v748 = vsub.f32 %v721, %v747
      %v749 = vsub.f32 %v724, %v747
      %v750 = vsub.f32 %v729, %v747
      %v751 = vsub.f32 %v732, %v747
      %v752 = vmul.f32 %v748, 1.442695
      %v753 = vpow.pop %v752
      %v754 = vmul.f32 %v749, 1.442695
      %v755 = vpow.pop %v754
      %v756 = vmul.f32 %v750, 1.442695
      %v757 = vpow.pop %v756
      %v758 = vmul.f32 %v751, 1.442695
      %v759 = vpow.pop %v758
      %v760 = vsel %vm327, %v753, 0.0
      %v761 = vsel %vm327, %v755, 0.0
      %v762 = vadd.f32 %v760, %v761
      %v763 = vsel %vm327, %v757, 0.0
      %v764 = vadd.f32 %v762, %v763
      %v765 = vsel %vm327, %v759, 0.0
      %v766 = vadd.f32 %v764, %v765
      %v767 = vrot.slane %v766, 4
      %v768 = vadd.f32 %v766, %v767
      %v769 = vrot.slane %v768, 2
      %v770 = vadd.f32 %v768, %v769
      %v771 = vrot.slane %v770, 1
      %v772 = vadd.f32 %v770, %v771
      %v773 = vrcp.pop %v772
      %v774 = vmul.f32 %v753, %v773
      %v775 = vmul.f32 %v755, %v773
      %v776 = vmul.f32 %v757, %v773
      %v777 = vmul.f32 %v759, %v773
      %v778 = vpack.c.bf16 %v775, %v774
      %v779 = vpack.c.bf16 %v777, %v776
      %v781 = vsel %vm405, %v674, 0
      %783 = vmatprep.subr.bf16.mxu0 0
      %784 = vmatpush1.bf16.msra.mxu0 0
      %785 = vmatprep.subr.bf16.mxu0 0
      %786 = vmatpush1.bf16.msra.mxu0 0
      %787 = vmatprep.subr.bf16.mxu0 0
      %788 = vmatpush1.bf16.msra.mxu0 0
      %789 = vmatprep.subr.bf16.mxu0 0
      %790 = vmatpush1.bf16.msra.mxu0 0
      %791 = vmatprep.subr.bf16.mxu0 0
      %792 = vmatpush1.bf16.msra.mxu0 0
      %793 = vmatprep.subr.bf16.mxu0 0
      %794 = vmatpush1.bf16.msra.mxu0 0
      %795 = vmatprep.subr.bf16.mxu0 0
      %796 = vmatpush1.bf16.msra.mxu0 %v779
      %797 = vmatprep.subr.bf16.mxu0 0
      %798 = vmatpush1.bf16.msra.mxu0 %v778
      %799 = vmatprep.subr.bf16.mxu0 0
      %800 = vmatpush2.bf16.msra.mxu0 0
      %801 = vmatprep.subr.bf16.mxu0 0
      %802 = vmatpush2.bf16.msra.mxu0 0
      %803 = vmatprep.subr.bf16.mxu0 0
      %804 = vmatpush2.bf16.msra.mxu0 0
      %805 = vmatprep.subr.bf16.mxu0 0
      %806 = vmatpush2.bf16.msra.mxu0 0
      %807 = vmatprep.subr.bf16.mxu0 0
      %808 = vmatpush2.bf16.msra.mxu0 0
      %809 = vmatprep.subr.bf16.mxu0 0
      %810 = vmatpush2.bf16.msra.mxu0 0
      %811 = vmatprep.subr.bf16.mxu0 0
      %812 = vmatpush2.bf16.msra.mxu0 0
      %813 = vmatprep.subr.bf16.mxu0 0
      %814 = vmatpush2.bf16.msra.mxu0 0
      %815 = vmatprep.mubr.bf16.mxu0 0
      %816 = vmatmul.mubr.bf16.gmra.mxu0 %v781
      %v817 = vpop.f32.mrf.mxu0
      %v818 = vadd.f32 0.0, %v817
      %v819 = vpop.f32.mrf.mxu0
      %v820 = vpop.f32.mrf.mxu0
      %v821 = vpop.f32.mrf.mxu0
      %822 = vdwg.mxu0
      %v823 = vld [vmem:[#allocation2 + $0x8] sm:$0xff]
      %v824 = vpack.c.bf16 %v823, %v823
      %v825 = vld [vmem:[#allocation4 + $0x8] sm:$0xff]
      %v826 = vpack.c.bf16 %v825, %v825
      %829 = vrot.lane.b32.xlu0 %v671, 120
      %v830 = vpop.permute.xlu0 %829
      %831 = vrot.lane.b32.xlu0 %v672, 120
      %v832 = vpop.permute.xlu0 %831
      %v834 = vsel %vm675, %v830, 0
      %v837 = vsel %vm675, %v832, 0
      %v840 = vsel %vm682, %v824, 0
      %842 = vmatprep.subr.bf16.mxu0 0
      %843 = vmatpush1.bf16.msra.mxu0 0
      %844 = vmatprep.subr.bf16.mxu0 0
      %845 = vmatpush1.bf16.msra.mxu0 0
      %846 = vmatprep.subr.bf16.mxu0 0
      %847 = vmatpush1.bf16.msra.mxu0 0
      %848 = vmatprep.subr.bf16.mxu0 0
      %849 = vmatpush1.bf16.msra.mxu0 0
      %850 = vmatprep.subr.bf16.mxu0 0
      %851 = vmatpush1.bf16.msra.mxu0 0
      %852 = vmatprep.subr.bf16.mxu0 0
      %853 = vmatpush1.bf16.msra.mxu0 0
      %854 = vmatprep.subr.bf16.mxu0 0
      %855 = vmatpush1.bf16.msra.mxu0 0
      %856 = vmatprep.subr.bf16.mxu0 0
      %857 = vmatpush1.bf16.msra.mxu0 %v840
      %858 = vmatprep.subr.bf16.mxu0 0
      %859 = vmatpush2.bf16.msra.mxu0 0
      %860 = vmatprep.subr.bf16.mxu0 0
      %861 = vmatpush2.bf16.msra.mxu0 0
      %862 = vmatprep.subr.bf16.mxu0 0
      %863 = vmatpush2.bf16.msra.mxu0 0
      %864 = vmatprep.subr.bf16.mxu0 0
      %865 = vmatpush2.bf16.msra.mxu0 0
      %866 = vmatprep.subr.bf16.mxu0 0
      %867 = vmatpush2.bf16.msra.mxu0 0
      %868 = vmatprep.subr.bf16.mxu0 0
      %869 = vmatpush2.bf16.msra.mxu0 0
      %870 = vmatprep.subr.bf16.mxu0 0
      %871 = vmatpush2.bf16.msra.mxu0 0
      %872 = vmatprep.subr.bf16.mxu0 0
      %873 = vmatpush2.bf16.msra.mxu0 0
      %874 = vmatprep.mubr.bf16.mxu0 0
      %875 = vmatmul.mubr.bf16.gmra.mxu0 %v834
      %v876 = vpop.f32.mrf.mxu0
      %v877 = vadd.f32 %v661, %v876
      %v878 = vpop.f32.mrf.mxu0
      %v879 = vpop.f32.mrf.mxu0
      %v880 = vadd.f32 %v662, %v879
      %v881 = vpop.f32.mrf.mxu0
      %882 = vmatprep.mubr.bf16.mxu0 0
      %883 = vmatmul.mubr.bf16.gmra.mxu0 %v837
      %v884 = vpop.f32.mrf.mxu0
      %v885 = vadd.f32 %v663, %v884
      %v886 = vpop.f32.mrf.mxu0
      %v887 = vpop.f32.mrf.mxu0
      %v888 = vadd.f32 %v664, %v887
      %v889 = vpop.f32.mrf.mxu0
      %890 = vdwg.mxu0
      %v891 = vsel %vm327, %v877, -inf
      %v892 = vsel %vm327, %v880, -inf
      %v893 = vsel %vm327, %v885, -inf
      %v894 = vsel %vm327, %v888, -inf
      %v895 = vmax.f32 %v891, %v892
      %v896 = vmax.f32 %v893, %v894
      %v897 = vmax.f32 %v895, %v896
      %v898 = vrot.slane %v897, 4
      %v899 = vmax.f32 %v897, %v898
      %v900 = vrot.slane %v899, 2
      %v901 = vmax.f32 %v899, %v900
      %v902 = vrot.slane %v901, 1
      %v903 = vmax.f32 %v901, %v902
      %v904 = vsub.f32 %v877, %v903
      %v905 = vsub.f32 %v880, %v903
      %v906 = vsub.f32 %v885, %v903
      %v907 = vsub.f32 %v888, %v903
      %v908 = vmul.f32 %v904, 1.442695
      %v909 = vpow.pop %v908
      %v910 = vmul.f32 %v905, 1.442695
      %v911 = vpow.pop %v910
      %v912 = vmul.f32 %v906, 1.442695
      %v913 = vpow.pop %v912
      %v914 = vmul.f32 %v907, 1.442695
      %v915 = vpow.pop %v914
      %v916 = vsel %vm327, %v909, 0.0
      %v917 = vsel %vm327, %v911, 0.0
      %v918 = vadd.f32 %v916, %v917
      %v919 = vsel %vm327, %v913, 0.0
      %v920 = vadd.f32 %v918, %v919
      %v921 = vsel %vm327, %v915, 0.0
      %v922 = vadd.f32 %v920, %v921
      %v923 = vrot.slane %v922, 4
      %v924 = vadd.f32 %v922, %v923
      %v925 = vrot.slane %v924, 2
      %v926 = vadd.f32 %v924, %v925
      %v927 = vrot.slane %v926, 1
      %v928 = vadd.f32 %v926, %v927
      %v929 = vrcp.pop %v928
      %v930 = vmul.f32 %v909, %v929
      %v931 = vmul.f32 %v911, %v929
      %v932 = vmul.f32 %v913, %v929
      %v933 = vmul.f32 %v915, %v929
      %v934 = vpack.c.bf16 %v931, %v930
      %v935 = vpack.c.bf16 %v933, %v932
      %v937 = vsel %vm405, %v826, 0
      %939 = vmatprep.subr.bf16.mxu0 0
      %940 = vmatpush1.bf16.msra.mxu0 0
      %941 = vmatprep.subr.bf16.mxu0 0
      %942 = vmatpush1.bf16.msra.mxu0 0
      %943 = vmatprep.subr.bf16.mxu0 0
      %944 = vmatpush1.bf16.msra.mxu0 0
      %945 = vmatprep.subr.bf16.mxu0 0
      %946 = vmatpush1.bf16.msra.mxu0 0
      %947 = vmatprep.subr.bf16.mxu0 0
      %948 = vmatpush1.bf16.msra.mxu0 0
      %949 = vmatprep.subr.bf16.mxu0 0
      %950 = vmatpush1.bf16.msra.mxu0 0
      %951 = vmatprep.subr.bf16.mxu0 0
      %952 = vmatpush1.bf16.msra.mxu0 %v935
      %953 = vmatprep.subr.bf16.mxu0 0
      %954 = vmatpush1.bf16.msra.mxu0 %v934
      %955 = vmatprep.subr.bf16.mxu0 0
      %956 = vmatpush2.bf16.msra.mxu0 0
      %957 = vmatprep.subr.bf16.mxu0 0
      %958 = vmatpush2.bf16.msra.mxu0 0
      %959 = vmatprep.subr.bf16.mxu0 0
      %960 = vmatpush2.bf16.msra.mxu0 0
      %961 = vmatprep.subr.bf16.mxu0 0
      %962 = vmatpush2.bf16.msra.mxu0 0
      %963 = vmatprep.subr.bf16.mxu0 0
      %964 = vmatpush2.bf16.msra.mxu0 0
      %965 = vmatprep.subr.bf16.mxu0 0
      %966 = vmatpush2.bf16.msra.mxu0 0
      %967 = vmatprep.subr.bf16.mxu0 0
      %968 = vmatpush2.bf16.msra.mxu0 0
      %969 = vmatprep.subr.bf16.mxu0 0
      %970 = vmatpush2.bf16.msra.mxu0 0
      %971 = vmatprep.mubr.bf16.mxu0 0
      %972 = vmatmul.mubr.bf16.gmra.mxu0 %v937
      %v973 = vpop.f32.mrf.mxu0
      %v974 = vadd.f32 0.0, %v973
      %v975 = vpop.f32.mrf.mxu0
      %v976 = vpop.f32.mrf.mxu0
      %v977 = vpop.f32.mrf.mxu0
      %978 = vdwg.mxu0
      %v979 = vld [vmem:[#allocation2 + $0x10] sm:$0xff]
      %v980 = vpack.c.bf16 %v979, %v979
      %v981 = vld [vmem:[#allocation4 + $0x10] sm:$0xff]
      %v982 = vpack.c.bf16 %v981, %v981
      %983 = vrot.lane.b32.xlu0 %v671, 112
      %v984 = vpop.permute.xlu0 %983
      %985 = vrot.lane.b32.xlu0 %v672, 112
      %v986 = vpop.permute.xlu0 %985
      %v988 = vsel %vm675, %v984, 0
      %v991 = vsel %vm675, %v986, 0
      %v994 = vsel %vm682, %v980, 0
      %996 = vmatprep.subr.bf16.mxu0 0
      %997 = vmatpush1.bf16.msra.mxu0 0
      %998 = vmatprep.subr.bf16.mxu0 0
      %999 = vmatpush1.bf16.msra.mxu0 0
      %1000 = vmatprep.subr.bf16.mxu0 0
      %1001 = vmatpush1.bf16.msra.mxu0 0
      %1002 = vmatprep.subr.bf16.mxu0 0
      %1003 = vmatpush1.bf16.msra.mxu0 0
      %1004 = vmatprep.subr.bf16.mxu0 0
      %1005 = vmatpush1.bf16.msra.mxu0 0
      %1006 = vmatprep.subr.bf16.mxu0 0
      %1007 = vmatpush1.bf16.msra.mxu0 0
      %1008 = vmatprep.subr.bf16.mxu0 0
      %1009 = vmatpush1.bf16.msra.mxu0 0
      %1010 = vmatprep.subr.bf16.mxu0 0
      %1011 = vmatpush1.bf16.msra.mxu0 %v994
      %1012 = vmatprep.subr.bf16.mxu0 0
      %1013 = vmatpush2.bf16.msra.mxu0 0
      %1014 = vmatprep.subr.bf16.mxu0 0
      %1015 = vmatpush2.bf16.msra.mxu0 0
      %1016 = vmatprep.subr.bf16.mxu0 0
      %1017 = vmatpush2.bf16.msra.mxu0 0
      %1018 = vmatprep.subr.bf16.mxu0 0
      %1019 = vmatpush2.bf16.msra.mxu0 0
      %1020 = vmatprep.subr.bf16.mxu0 0
      %1021 = vmatpush2.bf16.msra.mxu0 0
      %1022 = vmatprep.subr.bf16.mxu0 0
      %1023 = vmatpush2.bf16.msra.mxu0 0
      %1024 = vmatprep.subr.bf16.mxu0 0
      %1025 = vmatpush2.bf16.msra.mxu0 0
      %1026 = vmatprep.subr.bf16.mxu0 0
      %1027 = vmatpush2.bf16.msra.mxu0 0
      %1028 = vmatprep.mubr.bf16.mxu0 0
      %1029 = vmatmul.mubr.bf16.gmra.mxu0 %v988
      %v1030 = vpop.f32.mrf.mxu0
      %v1031 = vadd.f32 %v661, %v1030
      %v1032 = vpop.f32.mrf.mxu0
      %v1033 = vpop.f32.mrf.mxu0
      %v1034 = vadd.f32 %v662, %v1033
      %v1035 = vpop.f32.mrf.mxu0
      %1036 = vmatprep.mubr.bf16.mxu0 0
      %1037 = vmatmul.mubr.bf16.gmra.mxu0 %v991
      %v1038 = vpop.f32.mrf.mxu0
      %v1039 = vadd.f32 %v663, %v1038
      %v1040 = vpop.f32.mrf.mxu0
      %v1041 = vpop.f32.mrf.mxu0
      %v1042 = vadd.f32 %v664, %v1041
      %v1043 = vpop.f32.mrf.mxu0
      %1044 = vdwg.mxu0
      %v1045 = vsel %vm327, %v1031, -inf
      %v1046 = vsel %vm327, %v1034, -inf
      %v1047 = vsel %vm327, %v1039, -inf
      %v1048 = vsel %vm327, %v1042, -inf
      %v1049 = vmax.f32 %v1045, %v1046
      %v1050 = vmax.f32 %v1047, %v1048
      %v1051 = vmax.f32 %v1049, %v1050
      %v1052 = vrot.slane %v1051, 4
      %v1053 = vmax.f32 %v1051, %v1052
      %v1054 = vrot.slane %v1053, 2
      %v1055 = vmax.f32 %v1053, %v1054
      %v1056 = vrot.slane %v1055, 1
      %v1057 = vmax.f32 %v1055, %v1056
      %v1058 = vsub.f32 %v1031, %v1057
      %v1059 = vsub.f32 %v1034, %v1057
      %v1060 = vsub.f32 %v1039, %v1057
      %v1061 = vsub.f32 %v1042, %v1057
      %v1062 = vmul.f32 %v1058, 1.442695
      %v1063 = vpow.pop %v1062
      %v1064 = vmul.f32 %v1059, 1.442695
      %v1065 = vpow.pop %v1064
      %v1066 = vmul.f32 %v1060, 1.442695
      %v1067 = vpow.pop %v1066
      %v1068 = vmul.f32 %v1061, 1.442695
      %v1069 = vpow.pop %v1068
      %v1070 = vsel %vm327, %v1063, 0.0
      %v1071 = vsel %vm327, %v1065, 0.0
      %v1072 = vadd.f32 %v1070, %v1071
      %v1073 = vsel %vm327, %v1067, 0.0
      %v1074 = vadd.f32 %v1072, %v1073
      %v1075 = vsel %vm327, %v1069, 0.0
      %v1076 = vadd.f32 %v1074, %v1075
      %v1077 = vrot.slane %v1076, 4
      %v1078 = vadd.f32 %v1076, %v1077
      %v1079 = vrot.slane %v1078, 2
      %v1080 = vadd.f32 %v1078, %v1079
      %v1081 = vrot.slane %v1080, 1
      %v1082 = vadd.f32 %v1080, %v1081
      %v1083 = vrcp.pop %v1082
      %v1084 = vmul.f32 %v1063, %v1083
      %v1085 = vmul.f32 %v1065, %v1083
      %v1086 = vmul.f32 %v1067, %v1083
      %v1087 = vmul.f32 %v1069, %v1083
      %v1088 = vpack.c.bf16 %v1085, %v1084
      %v1089 = vpack.c.bf16 %v1087, %v1086
      %v1091 = vsel %vm405, %v982, 0
      %1093 = vmatprep.subr.bf16.mxu0 0
      %1094 = vmatpush1.bf16.msra.mxu0 0
      %1095 = vmatprep.subr.bf16.mxu0 0
      %1096 = vmatpush1.bf16.msra.mxu0 0
      %1097 = vmatprep.subr.bf16.mxu0 0
      %1098 = vmatpush1.bf16.msra.mxu0 0
      %1099 = vmatprep.subr.bf16.mxu0 0
      %1100 = vmatpush1.bf16.msra.mxu0 0
      %1101 = vmatprep.subr.bf16.mxu0 0
      %1102 = vmatpush1.bf16.msra.mxu0 0
      %1103 = vmatprep.subr.bf16.mxu0 0
      %1104 = vmatpush1.bf16.msra.mxu0 0
      %1105 = vmatprep.subr.bf16.mxu0 0
      %1106 = vmatpush1.bf16.msra.mxu0 %v1089
      %1107 = vmatprep.subr.bf16.mxu0 0
      %1108 = vmatpush1.bf16.msra.mxu0 %v1088
      %1109 = vmatprep.subr.bf16.mxu0 0
      %1110 = vmatpush2.bf16.msra.mxu0 0
      %1111 = vmatprep.subr.bf16.mxu0 0
      %1112 = vmatpush2.bf16.msra.mxu0 0
      %1113 = vmatprep.subr.bf16.mxu0 0
      %1114 = vmatpush2.bf16.msra.mxu0 0
      %1115 = vmatprep.subr.bf16.mxu0 0
      %1116 = vmatpush2.bf16.msra.mxu0 0
      %1117 = vmatprep.subr.bf16.mxu0 0
      %1118 = vmatpush2.bf16.msra.mxu0 0
      %1119 = vmatprep.subr.bf16.mxu0 0
      %1120 = vmatpush2.bf16.msra.mxu0 0
      %1121 = vmatprep.subr.bf16.mxu0 0
      %1122 = vmatpush2.bf16.msra.mxu0 0
      %1123 = vmatprep.subr.bf16.mxu0 0
      %1124 = vmatpush2.bf16.msra.mxu0 0
      %1125 = vmatprep.mubr.bf16.mxu0 0
      %1126 = vmatmul.mubr.bf16.gmra.mxu0 %v1091
      %v1127 = vpop.f32.mrf.mxu0
      %v1128 = vadd.f32 0.0, %v1127
      %v1129 = vpop.f32.mrf.mxu0
      %v1130 = vpop.f32.mrf.mxu0
      %v1131 = vpop.f32.mrf.mxu0
      %1132 = vdwg.mxu0
      %v1133 = vld [vmem:[#allocation2 + $0x18] sm:$0xff]
      %v1134 = vpack.c.bf16 %v1133, %v1133
      %v1135 = vld [vmem:[#allocation4 + $0x18] sm:$0xff]
      %v1136 = vpack.c.bf16 %v1135, %v1135
      %1137 = vrot.lane.b32.xlu0 %v671, 104
      %v1138 = vpop.permute.xlu0 %1137
      %1139 = vrot.lane.b32.xlu0 %v672, 104
      %v1140 = vpop.permute.xlu0 %1139
      %v1142 = vsel %vm675, %v1138, 0
      %v1145 = vsel %vm675, %v1140, 0
      %v1148 = vsel %vm682, %v1134, 0
      %1150 = vmatprep.subr.bf16.mxu0 0
      %1151 = vmatpush1.bf16.msra.mxu0 0
      %1152 = vmatprep.subr.bf16.mxu0 0
      %1153 = vmatpush1.bf16.msra.mxu0 0
      %1154 = vmatprep.subr.bf16.mxu0 0
      %1155 = vmatpush1.bf16.msra.mxu0 0
      %1156 = vmatprep.subr.bf16.mxu0 0
      %1157 = vmatpush1.bf16.msra.mxu0 0
      %1158 = vmatprep.subr.bf16.mxu0 0
      %1159 = vmatpush1.bf16.msra.mxu0 0
      %1160 = vmatprep.subr.bf16.mxu0 0
      %1161 = vmatpush1.bf16.msra.mxu0 0
      %1162 = vmatprep.subr.bf16.mxu0 0
      %1163 = vmatpush1.bf16.msra.mxu0 0
      %1164 = vmatprep.subr.bf16.mxu0 0
      %1165 = vmatpush1.bf16.msra.mxu0 %v1148
      %1166 = vmatprep.subr.bf16.mxu0 0
      %1167 = vmatpush2.bf16.msra.mxu0 0
      %1168 = vmatprep.subr.bf16.mxu0 0
      %1169 = vmatpush2.bf16.msra.mxu0 0
      %1170 = vmatprep.subr.bf16.mxu0 0
      %1171 = vmatpush2.bf16.msra.mxu0 0
      %1172 = vmatprep.subr.bf16.mxu0 0
      %1173 = vmatpush2.bf16.msra.mxu0 0
      %1174 = vmatprep.subr.bf16.mxu0 0
      %1175 = vmatpush2.bf16.msra.mxu0 0
      %1176 = vmatprep.subr.bf16.mxu0 0
      %1177 = vmatpush2.bf16.msra.mxu0 0
      %1178 = vmatprep.subr.bf16.mxu0 0
      %1179 = vmatpush2.bf16.msra.mxu0 0
      %1180 = vmatprep.subr.bf16.mxu0 0
      %1181 = vmatpush2.bf16.msra.mxu0 0
      %1182 = vmatprep.mubr.bf16.mxu0 0
      %1183 = vmatmul.mubr.bf16.gmra.mxu0 %v1142
      %v1184 = vpop.f32.mrf.mxu0
      %v1185 = vadd.f32 %v661, %v1184
      %v1186 = vpop.f32.mrf.mxu0
      %v1187 = vpop.f32.mrf.mxu0
      %v1188 = vadd.f32 %v662, %v1187
      %v1189 = vpop.f32.mrf.mxu0
      %1190 = vmatprep.mubr.bf16.mxu0 0
      %1191 = vmatmul.mubr.bf16.gmra.mxu0 %v1145
      %v1192 = vpop.f32.mrf.mxu0
      %v1193 = vadd.f32 %v663, %v1192
      %v1194 = vpop.f32.mrf.mxu0
      %v1195 = vpop.f32.mrf.mxu0
      %v1196 = vadd.f32 %v664, %v1195
      %v1197 = vpop.f32.mrf.mxu0
      %1198 = vdwg.mxu0
      %v1199 = vsel %vm327, %v1185, -inf
      %v1200 = vsel %vm327, %v1188, -inf
      %v1201 = vsel %vm327, %v1193, -inf
      %v1202 = vsel %vm327, %v1196, -inf
      %v1203 = vmax.f32 %v1199, %v1200
      %v1204 = vmax.f32 %v1201, %v1202
      %v1205 = vmax.f32 %v1203, %v1204
      %v1206 = vrot.slane %v1205, 4
      %v1207 = vmax.f32 %v1205, %v1206
      %v1208 = vrot.slane %v1207, 2
      %v1209 = vmax.f32 %v1207, %v1208
      %v1210 = vrot.slane %v1209, 1
      %v1211 = vmax.f32 %v1209, %v1210
      %v1212 = vsub.f32 %v1185, %v1211
      %v1213 = vsub.f32 %v1188, %v1211
      %v1214 = vsub.f32 %v1193, %v1211
      %v1215 = vsub.f32 %v1196, %v1211
      %v1216 = vmul.f32 %v1212, 1.442695
      %v1217 = vpow.pop %v1216
      %v1218 = vmul.f32 %v1213, 1.442695
      %v1219 = vpow.pop %v1218
      %v1220 = vmul.f32 %v1214, 1.442695
      %v1221 = vpow.pop %v1220
      %v1222 = vmul.f32 %v1215, 1.442695
      %v1223 = vpow.pop %v1222
      %v1224 = vsel %vm327, %v1217, 0.0
      %v1225 = vsel %vm327, %v1219, 0.0
      %v1226 = vadd.f32 %v1224, %v1225
      %v1227 = vsel %vm327, %v1221, 0.0
      %v1228 = vadd.f32 %v1226, %v1227
      %v1229 = vsel %vm327, %v1223, 0.0
      %v1230 = vadd.f32 %v1228, %v1229
      %v1231 = vrot.slane %v1230, 4
      %v1232 = vadd.f32 %v1230, %v1231
      %v1233 = vrot.slane %v1232, 2
      %v1234 = vadd.f32 %v1232, %v1233
      %v1235 = vrot.slane %v1234, 1
      %v1236 = vadd.f32 %v1234, %v1235
      %v1237 = vrcp.pop %v1236
      %v1238 = vmul.f32 %v1217, %v1237
      %v1239 = vmul.f32 %v1219, %v1237
      %v1240 = vmul.f32 %v1221, %v1237
      %v1241 = vmul.f32 %v1223, %v1237
      %v1242 = vpack.c.bf16 %v1239, %v1238
      %v1243 = vpack.c.bf16 %v1241, %v1240
      %v1245 = vsel %vm405, %v1136, 0
      %1247 = vmatprep.subr.bf16.mxu0 0
      %1248 = vmatpush1.bf16.msra.mxu0 0
      %1249 = vmatprep.subr.bf16.mxu0 0
      %1250 = vmatpush1.bf16.msra.mxu0 0
      %1251 = vmatprep.subr.bf16.mxu0 0
      %1252 = vmatpush1.bf16.msra.mxu0 0
      %1253 = vmatprep.subr.bf16.mxu0 0
      %1254 = vmatpush1.bf16.msra.mxu0 0
      %1255 = vmatprep.subr.bf16.mxu0 0
      %1256 = vmatpush1.bf16.msra.mxu0 0
      %1257 = vmatprep.subr.bf16.mxu0 0
      %1258 = vmatpush1.bf16.msra.mxu0 0
      %1259 = vmatprep.subr.bf16.mxu0 0
      %1260 = vmatpush1.bf16.msra.mxu0 %v1243
      %1261 = vmatprep.subr.bf16.mxu0 0
      %1262 = vmatpush1.bf16.msra.mxu0 %v1242
      %1263 = vmatprep.subr.bf16.mxu0 0
      %1264 = vmatpush2.bf16.msra.mxu0 0
      %1265 = vmatprep.subr.bf16.mxu0 0
      %1266 = vmatpush2.bf16.msra.mxu0 0
      %1267 = vmatprep.subr.bf16.mxu0 0
      %1268 = vmatpush2.bf16.msra.mxu0 0
      %1269 = vmatprep.subr.bf16.mxu0 0
      %1270 = vmatpush2.bf16.msra.mxu0 0
      %1271 = vmatprep.subr.bf16.mxu0 0
      %1272 = vmatpush2.bf16.msra.mxu0 0
      %1273 = vmatprep.subr.bf16.mxu0 0
      %1274 = vmatpush2.bf16.msra.mxu0 0
      %1275 = vmatprep.subr.bf16.mxu0 0
      %1276 = vmatpush2.bf16.msra.mxu0 0
      %1277 = vmatprep.subr.bf16.mxu0 0
      %1278 = vmatpush2.bf16.msra.mxu0 0
      %1279 = vmatprep.mubr.bf16.mxu0 0
      %1280 = vmatmul.mubr.bf16.gmra.mxu0 %v1245
      %v1281 = vpop.f32.mrf.mxu0
      %v1282 = vadd.f32 0.0, %v1281
      %v1283 = vpop.f32.mrf.mxu0
      %v1284 = vpop.f32.mrf.mxu0
      %v1285 = vpop.f32.mrf.mxu0
      %1286 = vdwg.mxu0
      %v1287 = vpack.c.bf16 %v974, %v818
      %v1288 = vpack.c.bf16 %v1282, %v1128
      %v1289 = vld [vmem:[%s5] sm:$0xf]
      %v1290 = vld [vmem:[%s5 + $0x4] sm:$0xf]
      %v1291 = vld [vmem:[%s5 + $0x8] sm:$0xf]
      %v1292 = vld [vmem:[%s5 + $0xc] sm:$0xf]
      %v1293 = vld [vmem:[%s6] sm:$0xff]
      %v1294 = vld [vmem:[%s6 + $0x8] sm:$0xff]
      %v1295 = vld [vmem:[%s6 + $0x10] sm:$0xff]
      %v1296 = vld [vmem:[%s6 + $0x18] sm:$0xff]
      %1298 = vset.pattern.permute.xlu0 0
      %1299 = vperm.xlu0 %1298, %v1293
      %v1300 = vpop.permute.xlu0 %1299
      %1303 = vset.pattern.permute.xlu0 0
      %1304 = vperm.xlu0 %1303, %v1294
      %v1305 = vpop.permute.xlu0 %1304
      %1308 = vset.pattern.permute.xlu0 0
      %1309 = vperm.xlu0 %1308, %v1295
      %v1310 = vpop.permute.xlu0 %1309
      %1313 = vset.pattern.permute.xlu0 0
      %1314 = vperm.xlu0 %1313, %v1296
      %v1315 = vpop.permute.xlu0 %1314
      %v1321 = vunpack.c.l.b16 %v1289
      %v1322 = vunpack.c.l.b16 %v1290
      %v1323 = vunpack.c.l.b16 %v1291
      %v1324 = vunpack.c.l.b16 %v1292
      %v1325 = vpack.c.b16 %v1322, %v1321
      %v1326 = vpack.c.b16 %v1324, %v1323
      %v1328 = vsel %vm405, %v1325, 0
      %v1331 = vsel %vm405, %v1326, 0
      %1333 = vmatprep.subr.bf16.mxu0 0
      %1334 = vmatpush1.bf16.msra.mxu0 0
      %1335 = vmatprep.subr.bf16.mxu0 0
      %1336 = vmatpush1.bf16.msra.mxu0 0
      %1337 = vmatprep.subr.bf16.mxu0 0
      %1338 = vmatpush1.bf16.msra.mxu0 0
      %1339 = vmatprep.subr.bf16.mxu0 0
      %1340 = vmatpush1.bf16.msra.mxu0 0
      %1341 = vmatprep.subr.bf16.mxu0 0
      %1342 = vmatpush1.bf16.msra.mxu0 0
      %1343 = vmatprep.subr.bf16.mxu0 0
      %1344 = vmatpush1.bf16.msra.mxu0 0
      %1345 = vmatprep.subr.bf16.mxu0 0
      %1346 = vmatpush1.bf16.msra.mxu0 %v1288
      %1347 = vmatprep.subr.bf16.mxu0 0
      %1348 = vmatpush1.bf16.msra.mxu0 %v1287
      %1349 = vmatprep.subr.bf16.mxu0 0
      %1350 = vmatpush2.bf16.msra.mxu0 0
      %1351 = vmatprep.subr.bf16.mxu0 0
      %1352 = vmatpush2.bf16.msra.mxu0 0
      %1353 = vmatprep.subr.bf16.mxu0 0
      %1354 = vmatpush2.bf16.msra.mxu0 0
      %1355 = vmatprep.subr.bf16.mxu0 0
      %1356 = vmatpush2.bf16.msra.mxu0 0
      %1357 = vmatprep.subr.bf16.mxu0 0
      %1358 = vmatpush2.bf16.msra.mxu0 0
      %1359 = vmatprep.subr.bf16.mxu0 0
      %1360 = vmatpush2.bf16.msra.mxu0 0
      %1361 = vmatprep.subr.bf16.mxu0 0
      %1362 = vmatpush2.bf16.msra.mxu0 0
      %1363 = vmatprep.subr.bf16.mxu0 0
      %1364 = vmatpush2.bf16.msra.mxu0 0
      %1365 = vmatprep.mubr.bf16.mxu0 0
      %1366 = vmatmul.mubr.bf16.gmra.mxu0 %v1328
      %v1367 = vpop.f32.mrf.mxu0
      %v1368 = vadd.f32 %v1300, %v1367
      %v1369 = vpop.f32.mrf.mxu0
      %v1370 = vpop.f32.mrf.mxu0
      %v1371 = vadd.f32 %v1305, %v1370
      %v1372 = vpop.f32.mrf.mxu0
      %1373 = vmatprep.mubr.bf16.mxu0 0
      %1374 = vmatmul.mubr.bf16.gmra.mxu0 %v1331
      %v1375 = vpop.f32.mrf.mxu0
      %v1376 = vadd.f32 %v1310, %v1375
      %v1377 = vpop.f32.mrf.mxu0
      %v1378 = vpop.f32.mrf.mxu0
      %v1379 = vadd.f32 %v1315, %v1378
      %v1380 = vpop.f32.mrf.mxu0
      %1381 = vdwg.mxu0
      %1382 = vst.msk [vmem:[%s305] sm:$0xff] %vm327, %v1368
      %1383 = vst.msk [vmem:[%s305 + $0x8] sm:$0xff] %vm327, %v1371
      %1384 = vst.msk [vmem:[%s305 + $0x10] sm:$0xff] %vm327, %v1376
      %1385 = vst.msk [vmem:[%s305 + $0x18] sm:$0xff] %vm327, %v1379
      %p1386 = scmp.lt.s32.totalorder %s19, 1
      %s1387 = scalar_select %p1386, %s19, 1
      %s1388 = smul.addr %s1387, 4
      %s1389 = smul.addr %s1388, 8
      %s1390 = scalar_lea.vmem %s8, %s1389
      // Predicated region
      $region53: #{attention_forward.1} parent=51 // pred_check
        %p1391 = pneg %p210
      $region54: #{attention_forward.1} parent=51 // pred_check_branch
        %1393 = sbr.rel (%p1391) target = $region56
      $region55: #{attention_forward.1} parent=51 // pred_region
        _
      $region56: #{attention_forward.1} parent=51 // pred_fallthru
        _
    $region52: #{attention_forward.1} parent=5 // pred_fallthru
      _
    %p1394 = scmp.le.s32.totalorder 2, %s14
    // Predicated region
    $region57: #{attention_forward.1} parent=5 // pred_check
      %p1395 = pneg %p1394
    $region58: #{attention_forward.1} parent=5 // pred_check_branch
      %1397 = sbr.rel (%p1395) target = $region60
    $region59: #{attention_forward.1} parent=5 // pred_region
      %s1398 = ssub.s32 %s14, 2
      // Predicated region
      $region61: #{attention_forward.1} parent=59 // pred_check
        %p1399 = pneg %p216
      $region62: #{attention_forward.1} parent=59 // pred_check_branch
        %1401 = sbr.rel (%p1399) target = $region64
      $region63: #{attention_forward.1} parent=59 // pred_region
        %p1402 = scmp.lt.s32.totalorder %s20, 1
        %s1403 = scalar_select %p1402, %s20, 1
        %s1404 = smul.addr %s1403, 4
        %s1405 = smul.addr %s1404, 8
        %s1406 = scalar_lea.vmem %s8, %s1405
      $region64: #{attention_forward.1} parent=59 // pred_fallthru
        _
    $region60: #{attention_forward.1} parent=5 // pred_fallthru
      _
  $region6: #{attention_forward.1} parent=0 // loop_footer
    %s18 = sadd.s32 1, %s14
  $region7: #{attention_forward.1} parent=0 // loop_footer_branch
    %13 = sbr.rel target = $region3
  $region8: #{attention_forward.1} parent=0 // loop_exit
    _

</llo_original>
